<compile_context>
chip_gen: v7x
topology: tpu7x:2x2x1
jax: 0.10.0
libtpu: 0.0.40
codegen_flags: <defaults>
</compile_context>

<pallas_src>
import math
import numpy as np

import jax
import jax.numpy as jnp
from jax.experimental import pallas as pl
from jax.experimental.pallas import tpu as pltpu


# ------------------------------------------------------------------
# configuration (scaled-down, semantics identical to the torch module)
# ------------------------------------------------------------------
N_HIDDEN = 32                 # n_input == n_hidden == n_latent == 32
SQRT_P = 8                    # module uses 64 (n_patch = 64*64); scaled down
N_PATCH = SQRT_P * SQRT_P     # patches per batch element (64)
N_BATCH = 2
N_OBS = 3                     # module: 10 (scaled down)
N_PRED = 4                    # module: 50 (scaled down)
T_OUT = N_OBS + N_PRED - 1    # number of predictions the module returns
EMBED = N_HIDDEN + 2          # 34 = hidden + 2-d patch-position label
N_NEIGH = 9                   # 3x3 neighborhood (active branch in the module)
CENTER = 4                    # attn_vectors[4] for the 9-neighbor case
N_NODE = N_BATCH * N_PATCH    # 128 flat nodes
ATTN_SCALE = 1.0 / math.sqrt(EMBED)   # torch MHA scales q by 1/sqrt(head_dim)


# ------------------------------------------------------------------
# Fused whole-sequence kernel.  grid = (batch, time); per-batch state lives in
# VMEM scratch and is re-initialized at t == 0.
# ------------------------------------------------------------------
def _fused_kernel(x_ref,                      # (1, P, H) input block at (t, b)
                  mask_ref,                   # (P, P)  f32 additive neighbor mask
                  pc_ref,                     # (P, P)  bf16 center permutation
                  wlstm_ref, blstm_ref,       # (2H,4H) bf16, (1,4H) f32
                  wqkv_ref, qkvb_ref,         # (H,3E)  bf16, (P,3E) f32
                  wos_ref, w2_ref,            # (E,H)   bf16, (H,H)  bf16
                  bias_ref,                   # (4, H)  f32: [b_os; b2; gamma; beta]
                  out_ref,                    # (1, P, H) prediction block
                  xh_ref, c_ref, prev_ref):   # scratch: [x||h] (P,2H), c, prev pred
    t = pl.program_id(1)
    H, E = N_HIDDEN, EMBED
    bf16 = jnp.bfloat16

    @pl.when(t == 0)
    def _init():
        xh_ref[...] = jnp.zeros_like(xh_ref)
        c_ref[...] = jnp.zeros_like(c_ref)
        prev_ref[...] = jnp.zeros_like(prev_ref)

    # input: x[t] for observation steps, previous prediction afterwards
    inp = jnp.where(t < N_OBS, x_ref[0], prev_ref[...])
    xh_ref[:, 0:H] = inp                      # [x || h_prev] slab, no concat

    # ---------------- LSTMCell: one fused bf16 matmul over [x || h] -----------
    gates = (jnp.dot(xh_ref[...].astype(bf16), wlstm_ref[...],
                     preferred_element_type=jnp.float32)
             + blstm_ref[...])                                        # (P, 4H)
    i_g = jax.nn.sigmoid(gates[:, 0 * H:1 * H])
    f_g = jax.nn.sigmoid(gates[:, 1 * H:2 * H])
    g_g = jnp.tanh(gates[:, 2 * H:3 * H])
    o_g = jax.nn.sigmoid(gates[:, 3 * H:4 * H])
    c_new = f_g * c_ref[...] + i_g * g_g
    h_new = o_g * jnp.tanh(c_new)
    c_ref[...] = c_new

    # -------- fused q|k|v projection (labels/biases/scale folded into qkvb) ---
    qkv = (jnp.dot(h_new.astype(bf16), wqkv_ref[...],
                   preferred_element_type=jnp.float32)
           + qkvb_ref[...])                                           # (P, 3E)
    q = qkv[:, 0:E]
    k = qkv[:, E:2 * E]
    v = qkv[:, 2 * E:3 * E]

    # -------- masked-dense neighborhood attention (lane-dense softmax) --------
    s = jax.lax.dot_general(q.astype(bf16), k.astype(bf16),
                            (((1,), (1,)), ((), ())),
                            preferred_element_type=jnp.float32)       # (P, P)
    s = s + mask_ref[...]
    m = jnp.max(s, axis=-1, keepdims=True)
    e = jnp.exp(s - m)
    denom = jnp.sum(e, axis=-1, keepdims=True)
    probs = e * pl.reciprocal(denom, approx=True)                     # (P, P)
    attn = jnp.dot(probs.astype(bf16), v.astype(bf16),
                   preferred_element_type=jnp.float32)                # (P, E)

    # -------- fused out_proj @ fc_sa, then center-gather permutation ----------
    sa = jnp.dot(attn.astype(bf16), wos_ref[...],
                 preferred_element_type=jnp.float32)                  # (P, H)
    sa_g = jnp.dot(pc_ref[...], sa.astype(bf16),
                   preferred_element_type=jnp.float32)                # (P, H)
    h_sa = h_new + sa_g + bias_ref[0:1, :]                            # + b_os
    xh_ref[:, H:2 * H] = h_sa                                         # h for t+1

    # ---------------- fc2 + LayerNorm(32) ----------------
    y = (jnp.dot(h_sa.astype(bf16), w2_ref[...],
                 preferred_element_type=jnp.float32)
         + bias_ref[1:2, :])                                          # + b2
    mu = jnp.mean(y, axis=-1, keepdims=True)
    d = y - mu
    var = jnp.mean(d * d, axis=-1, keepdims=True)
    pred = (d * jax.lax.rsqrt(var + 1e-5) * bias_ref[2:3, :]
            + bias_ref[3:4, :])                                       # gamma/beta

    prev_ref[...] = pred
    out_ref[0] = pred


def build_forward(operands):
    """operands: constant arrays in kernel order (everything after x)."""
    P, H = N_PATCH, N_HIDDEN

    def const_spec(a):
        # full-array block, constant index -> DMA'd once, resident in VMEM
        return pl.BlockSpec(a.shape, lambda b, t, n=a.ndim: (0,) * n)

    in_specs = [pl.BlockSpec(
        (1, P, H), lambda b, t: (jnp.minimum(t, N_OBS - 1), b, 0))]   # x, clamped
    in_specs += [const_spec(a) for a in operands]

    call = pl.pallas_call(
        _fused_kernel,
        out_shape=jax.ShapeDtypeStruct((T_OUT, N_NODE, H), jnp.float32),
        grid_spec=pltpu.PrefetchScalarGridSpec(
            num_scalar_prefetch=0,
            grid=(N_BATCH, T_OUT),          # batch (parallel) x time (recurrent)
            in_specs=in_specs,
            out_specs=pl.BlockSpec((1, P, H), lambda b, t: (t, b, 0)),
            scratch_shapes=[pltpu.VMEM((P, 2 * H), jnp.float32),   # [x || h]
                            pltpu.VMEM((P, H), jnp.float32),       # c
                            pltpu.VMEM((P, H), jnp.float32)],      # prev prediction
        ),
        compiler_params=pltpu.CompilerParams(
            dimension_semantics=("parallel", "arbitrary")),
    )

    def forward(x):
        return call(x, *operands)

    return forward


# ------------------------------------------------------------------
# Host-side constant construction (neighbor tables, masks, labels)
# ------------------------------------------------------------------
def make_neighbor_tables(sqrt_p):
    P = sqrt_p * sqrt_p
    idx = np.arange(P)
    rows = idx // sqrt_p
    cols = idx % sqrt_p
    nb = np.array([[-1, -1], [-1, 0], [-1, 1],
                   [0, -1], [0, 0], [0, 1],
                   [1, -1], [1, 0], [1, 1]])
    nr = rows[:, None] + nb[None, :, 0]
    nc = cols[:, None] + nb[None, :, 1]
    nr = nr.reshape(sqrt_p, sqrt_p, -1)
    nc = nc.reshape(sqrt_p, sqrt_p, -1)
    # boundary adjustment for the 3x3 case (matches the torch module): the
    # window shifts inward, so neighbors stay in-bounds and are all distinct.
    nr[0, :, :] += 1
    nr[-1, :, :] -= 1
    nc[:, 0, :] += 1
    nc[:, -1, :] -= 1
    return nr.reshape(P, -1), nc.reshape(P, -1)


def make_patch_label(sqrt_p):
    vals = np.arange(sqrt_p, dtype=np.float32) / sqrt_p
    row_lab = np.repeat(vals[:, None], sqrt_p, axis=1)   # [r, c] = r / s
    col_lab = np.repeat(vals[None, :], sqrt_p, axis=0)   # [r, c] = c / s
    lab = np.stack([row_lab, col_lab], axis=0).reshape(2, -1).T
    return lab.astype(np.float32)                        # (P, 2)


# ------------------------------------------------------------------
# Parameters (deterministic init) + kernel-operand preparation
# ------------------------------------------------------------------
def init_params(key):
    keys = jax.random.split(key, 12)
    s = 0.1
    H, E = N_HIDDEN, EMBED

    def rnd(k, shape):
        return jax.random.normal(k, shape, dtype=jnp.float32) * s

    p = {}
    # LSTMCell(32, 32): weight_ih (128,32), weight_hh (128,32), biases (128,)
    wih = rnd(keys[0], (4 * H, H))
    whh = rnd(keys[1], (4 * H, H))
    bih = rnd(keys[2], (4 * H,))
    bhh = rnd(keys[3], (4 * H,))
    p['w_lstm'] = jnp.concatenate([wih.T, whh.T], axis=0)    # (64, 128)
    p['b_lstm'] = (bih + bhh).reshape(1, -1)                 # (1, 128)
    # fc2: Linear(32, 32), ln2: LayerNorm(32)
    p['w2_t'] = rnd(keys[4], (H, H)).T
    p['b2'] = rnd(keys[5], (H,)).reshape(1, -1)
    p['gamma'] = jnp.ones((1, H), jnp.float32)
    p['beta'] = jnp.zeros((1, H), jnp.float32)
    # fc_sa: Linear(34, 32)
    p['wsa_t'] = rnd(keys[6], (H, E)).T                      # (34, 32)
    p['bsa'] = rnd(keys[7], (H,)).reshape(1, -1)
    # MultiheadAttention(embed_dim=34, num_heads=1)
    in_w = rnd(keys[8], (3 * E, E))
    in_b = rnd(keys[9], (3 * E,))
    p['wq_t'] = in_w[0 * E:1 * E].T                          # (34, 34)
    p['wk_t'] = in_w[1 * E:2 * E].T
    p['wv_t'] = in_w[2 * E:3 * E].T
    p['bq'] = in_b[0 * E:1 * E]
    p['bk'] = in_b[1 * E:2 * E]
    p['bv'] = in_b[2 * E:3 * E]
    p['wo_t'] = rnd(keys[10], (E, E)).T
    p['bo'] = rnd(keys[11], (E,)).reshape(1, -1)
    return p


def prepare_operands(p, nr, nc, label):
    """Fold labels / biases / scale into per-node biases, fuse weights, cast
    MXU operands to bf16, build the neighbor mask and center permutation."""
    H, E, P = N_HIDDEN, EMBED, N_PATCH
    bf16 = jnp.bfloat16
    nbr = nr * SQRT_P + nc                                   # (P, 9) flat neighbors

    # additive attention mask: 0 for the 9 neighbors, -1e30 elsewhere
    mask = np.full((P, P), -1e30, np.float32)
    mask[np.arange(P)[:, None], nbr] = 0.0
    # center-gather permutation: row p selects node nbr[p, CENTER]
    pc = np.zeros((P, P), np.float32)
    pc[np.arange(P), nbr[:, CENTER]] = 1.0

    lab = jnp.asarray(label)                                 # (P, 2)
    # fused q|k|v hidden weights, ATTN_SCALE folded into the q block
    w_qkv = jnp.concatenate(
        [p['wq_t'][:H] * ATTN_SCALE, p['wk_t'][:H], p['wv_t'][:H]], axis=1)  # (H, 3E)
    qb = (lab @ p['wq_t'][H:] + p['bq']) * ATTN_SCALE
    kb = lab @ p['wk_t'][H:] + p['bk']
    vb = lab @ p['wv_t'][H:] + p['bv']
    qkv_bias = jnp.concatenate([qb, kb, vb], axis=1)         # (P, 3E)

    # fold out_proj into fc_sa (both linear, no nonlinearity between them)
    w_os = p['wo_t'] @ p['wsa_t']                            # (E, H)
    b_os = p['bo'] @ p['wsa_t'] + p['bsa']                   # (1, H)
    bias_pack = jnp.concatenate(
        [b_os, p['b2'], p['gamma'], p['beta']], axis=0)      # (4, H)

    return [jnp.asarray(mask),
            jnp.asarray(pc).astype(bf16),
            p['w_lstm'].astype(bf16), p['b_lstm'],
            w_qkv.astype(bf16), qkv_bias,
            w_os.astype(bf16), p['w2_t'].astype(bf16),
            bias_pack]


# ------------------------------------------------------------------
# Pure-JAX reference: direct gather-based translation of the torch loop
# (bf16 casts at the matmul inputs to match the kernel's precision).
# ------------------------------------------------------------------
def reference_forward(x, p, nbr, label):
    B, P, H, E = N_BATCH, N_PATCH, N_HIDDEN, EMBED
    N = B * P
    lab_full = jnp.tile(jnp.asarray(label), (B, 1))          # (N, 2)
    bf16 = jnp.bfloat16

    def mm(a, b):
        return jnp.dot(a.astype(bf16), b.astype(bf16),
                       preferred_element_type=jnp.float32)

    h = jnp.zeros((N, H), jnp.float32)
    c = jnp.zeros((N, H), jnp.float32)
    preds = []
    for t in range(T_OUT):
        inp = x[t] if t < N_OBS else preds[-1]
        gates = mm(jnp.concatenate([inp, h], axis=-1), p['w_lstm']) + p['b_lstm']
        i_g = jax.nn.sigmoid(gates[:, :H])
        f_g = jax.nn.sigmoid(gates[:, H:2 * H])
        g_g = jnp.tanh(gates[:, 2 * H:3 * H])
        o_g = jax.nn.sigmoid(gates[:, 3 * H:])
        c = f_g * c + i_g * g_g
        h = o_g * jnp.tanh(c)

        e = jnp.concatenate([h, lab_full], axis=-1).reshape(B, P, E)
        gath = e[:, nbr, :]                                  # (B, P, 9, E)
        q = (mm(gath[:, :, CENTER, :].reshape(N, E), p['wq_t'])
             + p['bq']) * ATTN_SCALE
        k = (mm(gath.reshape(-1, E), p['wk_t']) + p['bk']).reshape(B, P, 9, E)
        v = (mm(gath.reshape(-1, E), p['wv_t']) + p['bv']).reshape(B, P, 9, E)
        s = jnp.einsum('bpe,bpje->bpj',
                       q.reshape(B, P, E).astype(bf16), k.astype(bf16),
                       preferred_element_type=jnp.float32)
        a = jax.nn.softmax(s, axis=-1)
        attn = jnp.einsum('bpj,bpje->bpe', a.astype(bf16), v.astype(bf16),
                          preferred_element_type=jnp.float32).reshape(N, E)
        attn = mm(attn, p['wo_t']) + p['bo']
        h = h + mm(attn, p['wsa_t']) + p['bsa']
        y = mm(h, p['w2_t']) + p['b2']
        mu = jnp.mean(y, axis=-1, keepdims=True)
        d = y - mu
        var = jnp.mean(d * d, axis=-1, keepdims=True)
        preds.append(d * jax.lax.rsqrt(var + 1e-5) * p['gamma'] + p['beta'])
    return jnp.stack(preds, axis=0)


# ------------------------------------------------------------------
if __name__ == "__main__":
    key = jax.random.PRNGKey(0)
    k_param, k_x = jax.random.split(key)

    params = init_params(k_param)
    nr_np, nc_np = make_neighbor_tables(SQRT_P)
    label_np = make_patch_label(SQRT_P)
    operands = prepare_operands(params, nr_np, nc_np, label_np)

    x = jax.random.normal(k_x, (N_OBS, N_NODE, N_HIDDEN), dtype=jnp.float32)

    fwd = jax.jit(build_forward(operands))
    out = fwd(x)
    jax.block_until_ready(out)

    expected_shape = (T_OUT, N_NODE, N_HIDDEN)
    assert out.shape == expected_shape, (out.shape, expected_shape)
    assert bool(jnp.all(jnp.isfinite(out)))

    # structural check against a direct gather-based reference (loose tolerance:
    # weight folding + approx reciprocal + accumulation order differ slightly)
    ref = reference_forward(x, params, nr_np * SQRT_P + nc_np, label_np)
    err = float(jnp.max(jnp.abs(out - ref)))
    assert err < 1e-1, f"max abs error vs reference: {err}"

    print("KERNEL_OK")
</pallas_src>

<mosaic_0001>
module attributes {stable_mosaic.version = 11 : i64} {
  func.func @_fused_kernel(%arg0: i32, %arg1: i32, %arg2: memref<1x64x32xf32, #tpu.memory_space<vmem>>, %arg3: memref<64x64xf32, #tpu.memory_space<vmem>>, %arg4: memref<64x64xbf16, #tpu.memory_space<vmem>>, %arg5: memref<64x128xbf16, #tpu.memory_space<vmem>>, %arg6: memref<1x128xf32, #tpu.memory_space<vmem>>, %arg7: memref<32x102xbf16, #tpu.memory_space<vmem>>, %arg8: memref<64x102xf32, #tpu.memory_space<vmem>>, %arg9: memref<34x32xbf16, #tpu.memory_space<vmem>>, %arg10: memref<32x32xbf16, #tpu.memory_space<vmem>>, %arg11: memref<4x32xf32, #tpu.memory_space<vmem>>, %arg12: memref<1x64x32xf32, #tpu.memory_space<vmem>>, %arg13: memref<64x64xf32, #tpu.memory_space<vmem>>, %arg14: memref<64x32xf32, #tpu.memory_space<vmem>>, %arg15: memref<64x32xf32, #tpu.memory_space<vmem>>) attributes {dimension_semantics = [#tpu.dimension_semantics<parallel>, #tpu.dimension_semantics<arbitrary>], iteration_bounds = array<i64: 2, 6>, scalar_prefetch = 0 : i64, scratch_operands = 3 : i64, tpu.core_type = #tpu.core_type<tc>, window_params = [{transform_indices = @transform_0, window_bounds = array<i64: 1, 64, 32>}, {pipeline_mode = #tpu.pipeline_mode<synchronous>, transform_indices = @transform_1, window_bounds = array<i64: 64, 64>}, {pipeline_mode = #tpu.pipeline_mode<synchronous>, transform_indices = @transform_2, window_bounds = array<i64: 64, 64>}, {pipeline_mode = #tpu.pipeline_mode<synchronous>, transform_indices = @transform_3, window_bounds = array<i64: 64, 128>}, {pipeline_mode = #tpu.pipeline_mode<synchronous>, transform_indices = @transform_4, window_bounds = array<i64: 1, 128>}, {pipeline_mode = #tpu.pipeline_mode<synchronous>, transform_indices = @transform_5, window_bounds = array<i64: 32, 102>}, {pipeline_mode = #tpu.pipeline_mode<synchronous>, transform_indices = @transform_6, window_bounds = array<i64: 64, 102>}, {pipeline_mode = #tpu.pipeline_mode<synchronous>, transform_indices = @transform_7, window_bounds = array<i64: 34, 32>}, {pipeline_mode = #tpu.pipeline_mode<synchronous>, transform_indices = @transform_8, window_bounds = array<i64: 32, 32>}, {pipeline_mode = #tpu.pipeline_mode<synchronous>, transform_indices = @transform_9, window_bounds = array<i64: 4, 32>}, {transform_indices = @transform_10, window_bounds = array<i64: 1, 64, 32>}]} {
    %c0_i32 = arith.constant 0 : i32
    %0 = arith.cmpi eq, %arg1, %c0_i32 : i32
    %1 = arith.extui %0 : i1 to i32
    %c0_i32_0 = arith.constant 0 : i32
    %2 = arith.cmpi ne, %1, %c0_i32_0 : i32
    scf.if %2 {
      %cst_56 = arith.constant 0.000000e+00 : f32
      %112 = vector.broadcast %cst_56 : f32 to vector<64x64xf32>
      %c0_57 = arith.constant 0 : index
      %c0_58 = arith.constant 0 : index
      %113 = vector.load %arg13[%c0_57, %c0_58] : memref<64x64xf32, #tpu.memory_space<vmem>>, vector<64x64xf32>
      tpu.vector_store %arg13[%c0_57, %c0_58], %112 {strides = array<i32>} : memref<64x64xf32, #tpu.memory_space<vmem>>, vector<64x64xf32>,
      %cst_59 = arith.constant 0.000000e+00 : f32
      %114 = vector.broadcast %cst_59 : f32 to vector<64x32xf32>
      %c0_60 = arith.constant 0 : index
      %c0_61 = arith.constant 0 : index
      %115 = vector.load %arg14[%c0_60, %c0_61] : memref<64x32xf32, #tpu.memory_space<vmem>>, vector<64x32xf32>
      tpu.vector_store %arg14[%c0_60, %c0_61], %114 {strides = array<i32>} : memref<64x32xf32, #tpu.memory_space<vmem>>, vector<64x32xf32>,
      %cst_62 = arith.constant 0.000000e+00 : f32
      %116 = vector.broadcast %cst_62 : f32 to vector<64x32xf32>
      %c0_63 = arith.constant 0 : index
      %c0_64 = arith.constant 0 : index
      %117 = vector.load %arg15[%c0_63, %c0_64] : memref<64x32xf32, #tpu.memory_space<vmem>>, vector<64x32xf32>
      tpu.vector_store %arg15[%c0_63, %c0_64], %116 {strides = array<i32>} : memref<64x32xf32, #tpu.memory_space<vmem>>, vector<64x32xf32>,
    } else {
    }
    %c3_i32 = arith.constant 3 : i32
    %3 = arith.cmpi slt, %arg1, %c3_i32 : i32
    %c0 = arith.constant 0 : index
    %c0_1 = arith.constant 0 : index
    %c0_2 = arith.constant 0 : index
    %4 = vector.load %arg2[%c0, %c0_1, %c0_2] : memref<1x64x32xf32, #tpu.memory_space<vmem>>, vector<1x64x32xf32>
    %5 = vector.shape_cast %4 : vector<1x64x32xf32> to vector<64x32xf32>
    %c0_3 = arith.constant 0 : index
    %c0_4 = arith.constant 0 : index
    %6 = vector.load %arg15[%c0_3, %c0_4] : memref<64x32xf32, #tpu.memory_space<vmem>>, vector<64x32xf32>
    %7 = arith.select %3, %5, %6 : vector<64x32xf32>
    %c0_5 = arith.constant 0 : index
    %c0_6 = arith.constant 0 : index
    %8 = vector.load %arg13[%c0_5, %c0_6] : memref<64x64xf32, #tpu.memory_space<vmem>>, vector<64x32xf32>
    tpu.vector_store %arg13[%c0_5, %c0_6], %7 {strides = array<i32>} : memref<64x64xf32, #tpu.memory_space<vmem>>, vector<64x32xf32>,
    %c0_7 = arith.constant 0 : index
    %c0_8 = arith.constant 0 : index
    %9 = vector.load %arg13[%c0_7, %c0_8] : memref<64x64xf32, #tpu.memory_space<vmem>>, vector<64x64xf32>
    %10 = arith.truncf %9 : vector<64x64xf32> to vector<64x64xbf16>
    %c0_9 = arith.constant 0 : index
    %c0_10 = arith.constant 0 : index
    %11 = vector.load %arg5[%c0_9, %c0_10] : memref<64x128xbf16, #tpu.memory_space<vmem>>, vector<64x128xbf16>
    %cst = arith.constant dense<0.000000e+00> : vector<64x128xf32>
    %12 = tpu.matmul %10, %11, %cst {dimension_numbers = #tpu.dot_dimension_numbers<[1], [0], [0], [1], [0, 0, 1, 1], [], []>} : vector<64x64xbf16>, vector<64x128xbf16>, vector<64x128xf32> -> vector<64x128xf32>
    %c0_11 = arith.constant 0 : index
    %c0_12 = arith.constant 0 : index
    %13 = vector.load %arg6[%c0_11, %c0_12] : memref<1x128xf32, #tpu.memory_space<vmem>>, vector<1x128xf32>
    %14 = vector.broadcast %13 : vector<1x128xf32> to vector<64x128xf32>
    %15 = arith.addf %12, %14 : vector<64x128xf32>
    %16 = vector.extract_strided_slice %15 {offsets = [0, 0], sizes = [64, 32], strides = [1, 1]} : vector<64x128xf32> to vector<64x32xf32>
    %17 = arith.negf %16 : vector<64x32xf32>
    %18 = math.exp %17 : vector<64x32xf32>
    %cst_13 = arith.constant 1.000000e+00 : f32
    %19 = vector.broadcast %cst_13 : f32 to vector<64x32xf32>
    %20 = arith.addf %19, %18 : vector<64x32xf32>
    %21 = arith.divf %19, %20 : vector<64x32xf32>
    %22 = vector.extract_strided_slice %15 {offsets = [0, 32], sizes = [64, 32], strides = [1, 1]} : vector<64x128xf32> to vector<64x32xf32>
    %23 = arith.negf %22 : vector<64x32xf32>
    %24 = math.exp %23 : vector<64x32xf32>
    %cst_14 = arith.constant 1.000000e+00 : f32
    %25 = vector.broadcast %cst_14 : f32 to vector<64x32xf32>
    %26 = arith.addf %25, %24 : vector<64x32xf32>
    %27 = arith.divf %25, %26 : vector<64x32xf32>
    %28 = vector.extract_strided_slice %15 {offsets = [0, 64], sizes = [64, 32], strides = [1, 1]} : vector<64x128xf32> to vector<64x32xf32>
    %29 = math.tanh %28 : vector<64x32xf32>
    %30 = vector.extract_strided_slice %15 {offsets = [0, 96], sizes = [64, 32], strides = [1, 1]} : vector<64x128xf32> to vector<64x32xf32>
    %31 = arith.negf %30 : vector<64x32xf32>
    %32 = math.exp %31 : vector<64x32xf32>
    %cst_15 = arith.constant 1.000000e+00 : f32
    %33 = vector.broadcast %cst_15 : f32 to vector<64x32xf32>
    %34 = arith.addf %33, %32 : vector<64x32xf32>
    %35 = arith.divf %33, %34 : vector<64x32xf32>
    %c0_16 = arith.constant 0 : index
    %c0_17 = arith.constant 0 : index
    %36 = vector.load %arg14[%c0_16, %c0_17] : memref<64x32xf32, #tpu.memory_space<vmem>>, vector<64x32xf32>
    %37 = arith.mulf %27, %36 : vector<64x32xf32>
    %38 = arith.mulf %21, %29 : vector<64x32xf32>
    %39 = arith.addf %37, %38 : vector<64x32xf32>
    %40 = math.tanh %39 : vector<64x32xf32>
    %41 = arith.mulf %35, %40 : vector<64x32xf32>
    %c0_18 = arith.constant 0 : index
    %c0_19 = arith.constant 0 : index
    %42 = vector.load %arg14[%c0_18, %c0_19] : memref<64x32xf32, #tpu.memory_space<vmem>>, vector<64x32xf32>
    tpu.vector_store %arg14[%c0_18, %c0_19], %39 {strides = array<i32>} : memref<64x32xf32, #tpu.memory_space<vmem>>, vector<64x32xf32>,
    %43 = arith.truncf %41 : vector<64x32xf32> to vector<64x32xbf16>
    %c0_20 = arith.constant 0 : index
    %c0_21 = arith.constant 0 : index
    %44 = vector.load %arg7[%c0_20, %c0_21] : memref<32x102xbf16, #tpu.memory_space<vmem>>, vector<32x102xbf16>
    %cst_22 = arith.constant dense<0.000000e+00> : vector<64x102xf32>
    %45 = tpu.matmul %43, %44, %cst_22 {dimension_numbers = #tpu.dot_dimension_numbers<[1], [0], [0], [1], [0, 0, 1, 1], [], []>} : vector<64x32xbf16>, vector<32x102xbf16>, vector<64x102xf32> -> vector<64x102xf32>
    %c0_23 = arith.constant 0 : index
    %c0_24 = arith.constant 0 : index
    %46 = vector.load %arg8[%c0_23, %c0_24] : memref<64x102xf32, #tpu.memory_space<vmem>>, vector<64x102xf32>
    %47 = arith.addf %45, %46 : vector<64x102xf32>
    %48 = vector.extract_strided_slice %47 {offsets = [0, 0], sizes = [64, 34], strides = [1, 1]} : vector<64x102xf32> to vector<64x34xf32>
    %49 = vector.extract_strided_slice %47 {offsets = [0, 34], sizes = [64, 34], strides = [1, 1]} : vector<64x102xf32> to vector<64x34xf32>
    %50 = vector.extract_strided_slice %47 {offsets = [0, 68], sizes = [64, 34], strides = [1, 1]} : vector<64x102xf32> to vector<64x34xf32>
    %51 = arith.truncf %48 : vector<64x34xf32> to vector<64x34xbf16>
    %52 = arith.truncf %49 : vector<64x34xf32> to vector<64x34xbf16>
    %cst_25 = arith.constant dense<0.000000e+00> : vector<64x64xf32>
    %53 = tpu.matmul %51, %52, %cst_25 {dimension_numbers = #tpu.dot_dimension_numbers<[1], [1], [0], [0], [0, 0, 1, 0], [], []>} : vector<64x34xbf16>, vector<64x34xbf16>, vector<64x64xf32> -> vector<64x64xf32>
    %c0_26 = arith.constant 0 : index
    %c0_27 = arith.constant 0 : index
    %54 = vector.load %arg3[%c0_26, %c0_27] : memref<64x64xf32, #tpu.memory_space<vmem>>, vector<64x64xf32>
    %55 = arith.addf %53, %54 : vector<64x64xf32>
    %cst_28 = arith.constant dense<0xFF800000> : vector<64xf32>
    %56 = vector.multi_reduction <maximumf>, %55, %cst_28 [1] : vector<64x64xf32> to vector<64xf32>
    %57 = vector.shape_cast %56 : vector<64xf32> to vector<64x1xf32>
    %58 = vector.broadcast %57 : vector<64x1xf32> to vector<64x64xf32>
    %59 = arith.subf %55, %58 : vector<64x64xf32>
    %60 = math.exp %59 : vector<64x64xf32>
    %cst_29 = arith.constant dense<0.000000e+00> : vector<64xf32>
    %61 = vector.multi_reduction <add>, %60, %cst_29 [1] : vector<64x64xf32> to vector<64xf32>
    %62 = vector.shape_cast %61 : vector<64xf32> to vector<64x1xf32>
    %63 = tpu.reciprocal %62 {approx = true} : vector<64x1xf32> -> vector<64x1xf32>
    %64 = vector.broadcast %63 : vector<64x1xf32> to vector<64x64xf32>
    %65 = arith.mulf %60, %64 : vector<64x64xf32>
    %66 = arith.truncf %65 : vector<64x64xf32> to vector<64x64xbf16>
    %67 = arith.truncf %50 : vector<64x34xf32> to vector<64x34xbf16>
    %cst_30 = arith.constant dense<0.000000e+00> : vector<64x34xf32>
    %68 = tpu.matmul %66, %67, %cst_30 {dimension_numbers = #tpu.dot_dimension_numbers<[1], [0], [0], [1], [0, 0, 1, 1], [], []>} : vector<64x64xbf16>, vector<64x34xbf16>, vector<64x34xf32> -> vector<64x34xf32>
    %69 = arith.truncf %68 : vector<64x34xf32> to vector<64x34xbf16>
    %c0_31 = arith.constant 0 : index
    %c0_32 = arith.constant 0 : index
    %70 = vector.load %arg9[%c0_31, %c0_32] : memref<34x32xbf16, #tpu.memory_space<vmem>>, vector<34x32xbf16>
    %cst_33 = arith.constant dense<0.000000e+00> : vector<64x32xf32>
    %71 = tpu.matmul %69, %70, %cst_33 {dimension_numbers = #tpu.dot_dimension_numbers<[1], [0], [0], [1], [0, 0, 1, 1], [], []>} : vector<64x34xbf16>, vector<34x32xbf16>, vector<64x32xf32> -> vector<64x32xf32>
    %c0_34 = arith.constant 0 : index
    %c0_35 = arith.constant 0 : index
    %72 = vector.load %arg4[%c0_34, %c0_35] : memref<64x64xbf16, #tpu.memory_space<vmem>>, vector<64x64xbf16>
    %73 = arith.truncf %71 : vector<64x32xf32> to vector<64x32xbf16>
    %cst_36 = arith.constant dense<0.000000e+00> : vector<64x32xf32>
    %74 = tpu.matmul %72, %73, %cst_36 {dimension_numbers = #tpu.dot_dimension_numbers<[1], [0], [0], [1], [0, 0, 1, 1], [], []>} : vector<64x64xbf16>, vector<64x32xbf16>, vector<64x32xf32> -> vector<64x32xf32>
    %75 = arith.addf %41, %74 : vector<64x32xf32>
    %c0_37 = arith.constant 0 : index
    %c0_38 = arith.constant 0 : index
    %76 = vector.load %arg11[%c0_37, %c0_38] : memref<4x32xf32, #tpu.memory_space<vmem>>, vector<1x32xf32>
    %77 = vector.broadcast %76 : vector<1x32xf32> to vector<64x32xf32>
    %78 = arith.addf %75, %77 : vector<64x32xf32>
    %c0_39 = arith.constant 0 : index
    %c32 = arith.constant 32 : index
    %79 = vector.load %arg13[%c0_39, %c32] : memref<64x64xf32, #tpu.memory_space<vmem>>, vector<64x32xf32>
    tpu.vector_store %arg13[%c0_39, %c32], %78 {strides = array<i32>} : memref<64x64xf32, #tpu.memory_space<vmem>>, vector<64x32xf32>,
    %80 = arith.truncf %78 : vector<64x32xf32> to vector<64x32xbf16>
    %c0_40 = arith.constant 0 : index
    %c0_41 = arith.constant 0 : index
    %81 = vector.load %arg10[%c0_40, %c0_41] : memref<32x32xbf16, #tpu.memory_space<vmem>>, vector<32x32xbf16>
    %cst_42 = arith.constant dense<0.000000e+00> : vector<64x32xf32>
    %82 = tpu.matmul %80, %81, %cst_42 {dimension_numbers = #tpu.dot_dimension_numbers<[1], [0], [0], [1], [0, 0, 1, 1], [], []>} : vector<64x32xbf16>, vector<32x32xbf16>, vector<64x32xf32> -> vector<64x32xf32>
    %c1 = arith.constant 1 : index
    %c0_43 = arith.constant 0 : index
    %83 = vector.load %arg11[%c1, %c0_43] : memref<4x32xf32, #tpu.memory_space<vmem>>, vector<1x32xf32>
    %84 = vector.broadcast %83 : vector<1x32xf32> to vector<64x32xf32>
    %85 = arith.addf %82, %84 : vector<64x32xf32>
    %cst_44 = arith.constant dense<0.000000e+00> : vector<64xf32>
    %86 = vector.multi_reduction <add>, %85, %cst_44 [1] : vector<64x32xf32> to vector<64xf32>
    %87 = vector.shape_cast %86 : vector<64xf32> to vector<64x1xf32>
    %cst_45 = arith.constant 3.200000e+01 : f32
    %88 = vector.broadcast %cst_45 : f32 to vector<64x1xf32>
    %89 = arith.divf %87, %88 : vector<64x1xf32>
    %90 = vector.broadcast %89 : vector<64x1xf32> to vector<64x32xf32>
    %91 = arith.subf %85, %90 : vector<64x32xf32>
    %92 = arith.mulf %91, %91 : vector<64x32xf32>
    %cst_46 = arith.constant dense<0.000000e+00> : vector<64xf32>
    %93 = vector.multi_reduction <add>, %92, %cst_46 [1] : vector<64x32xf32> to vector<64xf32>
    %94 = vector.shape_cast %93 : vector<64xf32> to vector<64x1xf32>
    %cst_47 = arith.constant 3.200000e+01 : f32
    %95 = vector.broadcast %cst_47 : f32 to vector<64x1xf32>
    %96 = arith.divf %94, %95 : vector<64x1xf32>
    %cst_48 = arith.constant 9.99999974E-6 : f32
    %97 = vector.broadcast %cst_48 : f32 to vector<64x1xf32>
    %98 = arith.addf %96, %97 : vector<64x1xf32>
    %99 = math.rsqrt %98 : vector<64x1xf32>
    %100 = vector.broadcast %99 : vector<64x1xf32> to vector<64x32xf32>
    %101 = arith.mulf %91, %100 : vector<64x32xf32>
    %c2 = arith.constant 2 : index
    %c0_49 = arith.constant 0 : index
    %102 = vector.load %arg11[%c2, %c0_49] : memref<4x32xf32, #tpu.memory_space<vmem>>, vector<1x32xf32>
    %103 = vector.broadcast %102 : vector<1x32xf32> to vector<64x32xf32>
    %104 = arith.mulf %101, %103 : vector<64x32xf32>
    %c3 = arith.constant 3 : index
    %c0_50 = arith.constant 0 : index
    %105 = vector.load %arg11[%c3, %c0_50] : memref<4x32xf32, #tpu.memory_space<vmem>>, vector<1x32xf32>
    %106 = vector.broadcast %105 : vector<1x32xf32> to vector<64x32xf32>
    %107 = arith.addf %104, %106 : vector<64x32xf32>
    %c0_51 = arith.constant 0 : index
    %c0_52 = arith.constant 0 : index
    %108 = vector.load %arg15[%c0_51, %c0_52] : memref<64x32xf32, #tpu.memory_space<vmem>>, vector<64x32xf32>
    tpu.vector_store %arg15[%c0_51, %c0_52], %107 {strides = array<i32>} : memref<64x32xf32, #tpu.memory_space<vmem>>, vector<64x32xf32>,
    %c0_53 = arith.constant 0 : index
    %c0_54 = arith.constant 0 : index
    %c0_55 = arith.constant 0 : index
    %109 = vector.load %arg12[%c0_53, %c0_54, %c0_55] : memref<1x64x32xf32, #tpu.memory_space<vmem>>, vector<1x64x32xf32>
    %110 = vector.shape_cast %109 : vector<1x64x32xf32> to vector<64x32xf32>
    %111 = vector.shape_cast %107 : vector<64x32xf32> to vector<1x64x32xf32>
    tpu.vector_store %arg12[%c0_53, %c0_54, %c0_55], %111 {strides = array<i32>} : memref<1x64x32xf32, #tpu.memory_space<vmem>>, vector<1x64x32xf32>,
    return
  }
  func.func @transform_0(%arg0: i32, %arg1: i32) -> (i32, i32, i32) {
    %c2_i32 = arith.constant 2 : i32
    %0 = arith.minsi %arg1, %c2_i32 : i32
    %c0_i32 = arith.constant 0 : i32
    %c0_i32_0 = arith.constant 0 : i32
    return %0, %arg0, %c0_i32 : i32, i32, i32
  }
  func.func @transform_1(%arg0: i32, %arg1: i32) -> (i32, i32) {
    %c0_i32 = arith.constant 0 : i32
    %c0_i32_0 = arith.constant 0 : i32
    %c0_i32_1 = arith.constant 0 : i32
    return %c0_i32, %c0_i32_0 : i32, i32
  }
  func.func @transform_2(%arg0: i32, %arg1: i32) -> (i32, i32) {
    %c0_i32 = arith.constant 0 : i32
    %c0_i32_0 = arith.constant 0 : i32
    %c0_i32_1 = arith.constant 0 : i32
    return %c0_i32, %c0_i32_0 : i32, i32
  }
  func.func @transform_3(%arg0: i32, %arg1: i32) -> (i32, i32) {
    %c0_i32 = arith.constant 0 : i32
    %c0_i32_0 = arith.constant 0 : i32
    %c0_i32_1 = arith.constant 0 : i32
    return %c0_i32, %c0_i32_0 : i32, i32
  }
  func.func @transform_4(%arg0: i32, %arg1: i32) -> (i32, i32) {
    %c0_i32 = arith.constant 0 : i32
    %c0_i32_0 = arith.constant 0 : i32
    %c0_i32_1 = arith.constant 0 : i32
    return %c0_i32, %c0_i32_0 : i32, i32
  }
  func.func @transform_5(%arg0: i32, %arg1: i32) -> (i32, i32) {
    %c0_i32 = arith.constant 0 : i32
    %c0_i32_0 = arith.constant 0 : i32
    %c0_i32_1 = arith.constant 0 : i32
    return %c0_i32, %c0_i32_0 : i32, i32
  }
  func.func @transform_6(%arg0: i32, %arg1: i32) -> (i32, i32) {
    %c0_i32 = arith.constant 0 : i32
    %c0_i32_0 = arith.constant 0 : i32
    %c0_i32_1 = arith.constant 0 : i32
    return %c0_i32, %c0_i32_0 : i32, i32
  }
  func.func @transform_7(%arg0: i32, %arg1: i32) -> (i32, i32) {
    %c0_i32 = arith.constant 0 : i32
    %c0_i32_0 = arith.constant 0 : i32
    %c0_i32_1 = arith.constant 0 : i32
    return %c0_i32, %c0_i32_0 : i32, i32
  }
  func.func @transform_8(%arg0: i32, %arg1: i32) -> (i32, i32) {
    %c0_i32 = arith.constant 0 : i32
    %c0_i32_0 = arith.constant 0 : i32
    %c0_i32_1 = arith.constant 0 : i32
    return %c0_i32, %c0_i32_0 : i32, i32
  }
  func.func @transform_9(%arg0: i32, %arg1: i32) -> (i32, i32) {
    %c0_i32 = arith.constant 0 : i32
    %c0_i32_0 = arith.constant 0 : i32
    %c0_i32_1 = arith.constant 0 : i32
    return %c0_i32, %c0_i32_0 : i32, i32
  }
  func.func @transform_10(%arg0: i32, %arg1: i32) -> (i32, i32, i32) {
    %c0_i32 = arith.constant 0 : i32
    %c0_i32_0 = arith.constant 0 : i32
    return %arg1, %arg0, %c0_i32 : i32, i32, i32
  }
}

</mosaic_0001>

<llo_original>
// kernel: forward.1
$region0: #{forward.1}
  #allocation0 [shape = 'u32[]', space=smem, size = 0x4, offset = 0x4, fixed_abs, tag = 'smem constant byte address 0x4 - core index']
  #allocation1 [shape = 'u32[144,128]{1,0:T(1,128)}', space=vmem, size = 0x12000, scoped, tag = 'internal scratch']
  #allocation2 [shape = 'f32[64,64]{1,0:T(8,128)}', space=vmem, size = 0x8000, scoped, tag = 'scratch operand']
  #allocation3 [shape = 'f32[64,32]{1,0:T(8,128)}', space=vmem, size = 0x8000, scoped, tag = 'scratch operand']
  #allocation4 [shape = 'f32[64,32]{1,0:T(8,128)}', space=vmem, size = 0x8000, scoped, tag = 'scratch operand']
  %s0 = inlined_call_operand.vmem [shape: f32[3,128,32], index: 0, kind: input, shape index: {}]
  %s1 = inlined_call_operand.vmem [shape: f32[64,64], index: 1, kind: input, shape index: {}]
  %s2 = inlined_call_operand.vmem [shape: bf16[64,64], index: 2, kind: input, shape index: {}]
  %s3 = inlined_call_operand.vmem [shape: bf16[64,128], index: 3, kind: input, shape index: {}]
  %s4 = inlined_call_operand.vmem [shape: f32[1,128], index: 4, kind: input, shape index: {}]
  %s5 = inlined_call_operand.vmem [shape: bf16[32,102], index: 5, kind: input, shape index: {}]
  %s6 = inlined_call_operand.vmem [shape: f32[64,102], index: 6, kind: input, shape index: {}]
  %s7 = inlined_call_operand.vmem [shape: bf16[34,32], index: 7, kind: input, shape index: {}]
  %s8 = inlined_call_operand.vmem [shape: bf16[32,32], index: 8, kind: input, shape index: {}]
  %s9 = inlined_call_operand.vmem [shape: f32[4,32], index: 9, kind: input, shape index: {}]
  %s10 = inlined_call_operand.vmem [shape: f32[6,128,32], index: 10, kind: output, shape index: {}]
  %s11 = sld [smem:[#allocation0]]
  $region77: #{forward.1} parent=0
    _
  %s13 = ssub.s32 1, %s11
  %s14 = scalar_select 0, %s13, %s11
  loop: start=0, step=1, limit=14
  $region2: #{forward.1} parent=0 // loop_pre_header
    _
  $region3: #{forward.1} parent=0 // loop_header
    %s16 = sphi 0, %s20
    %p17 = scmp.ge.s32.totalorder %s16, 14
    %s23 = sphi 0, %s35
    %s24 = sphi 0, %s31
    %s25 = sphi 0, %s23
    %s26 = sphi 0, %s24
    %s27 = sphi 0, %s25
    %s28 = sphi 0, %s26
    %s44 = sphi 0, %s46
    %s47 = sphi 0, %s44
    %s48 = sphi 0, %s47
    %s64 = sphi 0, %s48
    %s68 = sphi 0, %s68
    %s70 = sphi 0, %s68
    %s71 = sphi 0, %s70
    %s85 = sphi 0, %s71
    %s89 = sphi 0, %s89
    %s91 = sphi 0, %s89
    %s92 = sphi 0, %s91
    %s106 = sphi 0, %s92
    %s110 = sphi 0, %s110
    %s112 = sphi 0, %s110
    %s113 = sphi 0, %s112
    %s127 = sphi 0, %s113
    %s131 = sphi 0, %s131
    %s133 = sphi 0, %s131
    %s134 = sphi 0, %s133
    %s148 = sphi 0, %s134
    %s152 = sphi 0, %s152
    %s154 = sphi 0, %s152
    %s155 = sphi 0, %s154
    %s169 = sphi 0, %s155
    %s173 = sphi 0, %s173
    %s175 = sphi 0, %s173
    %s176 = sphi 0, %s175
    %s190 = sphi 0, %s176
    %s194 = sphi 0, %s194
    %s196 = sphi 0, %s194
    %s197 = sphi 0, %s196
    %s211 = sphi 0, %s197
    %s215 = sphi 0, %s215
    %s217 = sphi 0, %s215
    %s218 = sphi 0, %s217
    %s232 = sphi 0, %s218
    %s236 = sphi 0, %s236
    %s238 = sphi 0, %s236
    %s239 = sphi 0, %s238
    %s253 = sphi 0, %s239
    %s261 = sphi 0, %s263
    %s264 = sphi 0, %s261
    %s265 = sphi 0, %s264
    %s281 = sphi 0, %s265
  $region4: #{forward.1} parent=0 // loop_header_branch
    %19 = sbr.rel (%p17) target = $region8
  $region5: #{forward.1} parent=0 // loop_body
    %s21 = ssub.s32 %s16, 1
    %s22 = ssub.s32 %s16, 2
    %s29 = sadd.s32 1, %s24
    %p30 = scmp.ge.s32.totalorder %s29, 6
    %s31 = scalar_select %p30, 0, %s29
    %s32 = sadd.s32 1, %s23
    %s33 = scalar_select %p30, %s32, %s23
    %p34 = scmp.ge.s32.totalorder %s33, 2
    %s35 = scalar_select %p34, 0, %s33
    %p36 = scmp.lt.s32.totalorder %s24, 2
    %s37 = scalar_select %p36, %s24, 2
    %p38 = scmp.lt.s32.totalorder %s31, 2
    %s39 = scalar_select %p38, %s31, 2
    %s40 = ssub.s32 %s37, %s39
    %s41 = ssub.s32 %s23, %s35
    %s42 = sor.u32 %s40, %s41
    %p43 = scmp.eq.s32.totalorder %s42, 0
    %s45 = sadd.s32 %s44, 1
    %s46 = scalar_select %p43, %s44, %s45
    %p49 = pneg %p43
    %p50 = scmp.eq.s32.totalorder %s16, 11
    %p51 = por %p49, %p50
    %p52 = scmp.ne.s32.totalorder %s44, %s47
    %p53 = scmp.eq.s32.totalorder %s16, 0
    %p54 = por %p52, %p53
    %p55 = scmp.ne.s32.totalorder %s44, %s47
    %p56 = scmp.eq.s32.totalorder %s21, 11
    %p57 = por %p55, %p56
    %p58 = scmp.ne.s32.totalorder %s47, %s48
    %p59 = scmp.eq.s32.totalorder %s21, 0
    %p60 = por %p58, %p59
    %p61 = scmp.ne.s32.totalorder %s47, %s48
    %p62 = scmp.eq.s32.totalorder %s22, 11
    %p63 = por %p61, %p62
    %p65 = scmp.ne.s32.totalorder %s48, %s64
    %p66 = scmp.eq.s32.totalorder %s22, 0
    %p67 = por %p65, %p66
    %s69 = sadd.s32 %s68, 1
    %p72 = scmp.eq.s32.totalorder %s16, 11
    %p73 = scmp.ne.s32.totalorder %s68, %s70
    %p74 = scmp.eq.s32.totalorder %s16, 0
    %p75 = por %p73, %p74
    %p76 = scmp.ne.s32.totalorder %s68, %s70
    %p77 = scmp.eq.s32.totalorder %s21, 11
    %p78 = por %p76, %p77
    %p79 = scmp.ne.s32.totalorder %s70, %s71
    %p80 = scmp.eq.s32.totalorder %s21, 0
    %p81 = por %p79, %p80
    %p82 = scmp.ne.s32.totalorder %s70, %s71
    %p83 = scmp.eq.s32.totalorder %s22, 11
    %p84 = por %p82, %p83
    %p86 = scmp.ne.s32.totalorder %s71, %s85
    %p87 = scmp.eq.s32.totalorder %s22, 0
    %p88 = por %p86, %p87
    %s90 = sadd.s32 %s89, 1
    %p93 = scmp.eq.s32.totalorder %s16, 11
    %p94 = scmp.ne.s32.totalorder %s89, %s91
    %p95 = scmp.eq.s32.totalorder %s16, 0
    %p96 = por %p94, %p95
    %p97 = scmp.ne.s32.totalorder %s89, %s91
    %p98 = scmp.eq.s32.totalorder %s21, 11
    %p99 = por %p97, %p98
    %p100 = scmp.ne.s32.totalorder %s91, %s92
    %p101 = scmp.eq.s32.totalorder %s21, 0
    %p102 = por %p100, %p101
    %p103 = scmp.ne.s32.totalorder %s91, %s92
    %p104 = scmp.eq.s32.totalorder %s22, 11
    %p105 = por %p103, %p104
    %p107 = scmp.ne.s32.totalorder %s92, %s106
    %p108 = scmp.eq.s32.totalorder %s22, 0
    %p109 = por %p107, %p108
    %s111 = sadd.s32 %s110, 1
    %p114 = scmp.eq.s32.totalorder %s16, 11
    %p115 = scmp.ne.s32.totalorder %s110, %s112
    %p116 = scmp.eq.s32.totalorder %s16, 0
    %p117 = por %p115, %p116
    %p118 = scmp.ne.s32.totalorder %s110, %s112
    %p119 = scmp.eq.s32.totalorder %s21, 11
    %p120 = por %p118, %p119
    %p121 = scmp.ne.s32.totalorder %s112, %s113
    %p122 = scmp.eq.s32.totalorder %s21, 0
    %p123 = por %p121, %p122
    %p124 = scmp.ne.s32.totalorder %s112, %s113
    %p125 = scmp.eq.s32.totalorder %s22, 11
    %p126 = por %p124, %p125
    %p128 = scmp.ne.s32.totalorder %s113, %s127
    %p129 = scmp.eq.s32.totalorder %s22, 0
    %p130 = por %p128, %p129
    %s132 = sadd.s32 %s131, 1
    %p135 = scmp.eq.s32.totalorder %s16, 11
    %p136 = scmp.ne.s32.totalorder %s131, %s133
    %p137 = scmp.eq.s32.totalorder %s16, 0
    %p138 = por %p136, %p137
    %p139 = scmp.ne.s32.totalorder %s131, %s133
    %p140 = scmp.eq.s32.totalorder %s21, 11
    %p141 = por %p139, %p140
    %p142 = scmp.ne.s32.totalorder %s133, %s134
    %p143 = scmp.eq.s32.totalorder %s21, 0
    %p144 = por %p142, %p143
    %p145 = scmp.ne.s32.totalorder %s133, %s134
    %p146 = scmp.eq.s32.totalorder %s22, 11
    %p147 = por %p145, %p146
    %p149 = scmp.ne.s32.totalorder %s134, %s148
    %p150 = scmp.eq.s32.totalorder %s22, 0
    %p151 = por %p149, %p150
    %s153 = sadd.s32 %s152, 1
    %p156 = scmp.eq.s32.totalorder %s16, 11
    %p157 = scmp.ne.s32.totalorder %s152, %s154
    %p158 = scmp.eq.s32.totalorder %s16, 0
    %p159 = por %p157, %p158
    %p160 = scmp.ne.s32.totalorder %s152, %s154
    %p161 = scmp.eq.s32.totalorder %s21, 11
    %p162 = por %p160, %p161
    %p163 = scmp.ne.s32.totalorder %s154, %s155
    %p164 = scmp.eq.s32.totalorder %s21, 0
    %p165 = por %p163, %p164
    %p166 = scmp.ne.s32.totalorder %s154, %s155
    %p167 = scmp.eq.s32.totalorder %s22, 11
    %p168 = por %p166, %p167
    %p170 = scmp.ne.s32.totalorder %s155, %s169
    %p171 = scmp.eq.s32.totalorder %s22, 0
    %p172 = por %p170, %p171
    %s174 = sadd.s32 %s173, 1
    %p177 = scmp.eq.s32.totalorder %s16, 11
    %p178 = scmp.ne.s32.totalorder %s173, %s175
    %p179 = scmp.eq.s32.totalorder %s16, 0
    %p180 = por %p178, %p179
    %p181 = scmp.ne.s32.totalorder %s173, %s175
    %p182 = scmp.eq.s32.totalorder %s21, 11
    %p183 = por %p181, %p182
    %p184 = scmp.ne.s32.totalorder %s175, %s176
    %p185 = scmp.eq.s32.totalorder %s21, 0
    %p186 = por %p184, %p185
    %p187 = scmp.ne.s32.totalorder %s175, %s176
    %p188 = scmp.eq.s32.totalorder %s22, 11
    %p189 = por %p187, %p188
    %p191 = scmp.ne.s32.totalorder %s176, %s190
    %p192 = scmp.eq.s32.totalorder %s22, 0
    %p193 = por %p191, %p192
    %s195 = sadd.s32 %s194, 1
    %p198 = scmp.eq.s32.totalorder %s16, 11
    %p199 = scmp.ne.s32.totalorder %s194, %s196
    %p200 = scmp.eq.s32.totalorder %s16, 0
    %p201 = por %p199, %p200
    %p202 = scmp.ne.s32.totalorder %s194, %s196
    %p203 = scmp.eq.s32.totalorder %s21, 11
    %p204 = por %p202, %p203
    %p205 = scmp.ne.s32.totalorder %s196, %s197
    %p206 = scmp.eq.s32.totalorder %s21, 0
    %p207 = por %p205, %p206
    %p208 = scmp.ne.s32.totalorder %s196, %s197
    %p209 = scmp.eq.s32.totalorder %s22, 11
    %p210 = por %p208, %p209
    %p212 = scmp.ne.s32.totalorder %s197, %s211
    %p213 = scmp.eq.s32.totalorder %s22, 0
    %p214 = por %p212, %p213
    %s216 = sadd.s32 %s215, 1
    %p219 = scmp.eq.s32.totalorder %s16, 11
    %p220 = scmp.ne.s32.totalorder %s215, %s217
    %p221 = scmp.eq.s32.totalorder %s16, 0
    %p222 = por %p220, %p221
    %p223 = scmp.ne.s32.totalorder %s215, %s217
    %p224 = scmp.eq.s32.totalorder %s21, 11
    %p225 = por %p223, %p224
    %p226 = scmp.ne.s32.totalorder %s217, %s218
    %p227 = scmp.eq.s32.totalorder %s21, 0
    %p228 = por %p226, %p227
    %p229 = scmp.ne.s32.totalorder %s217, %s218
    %p230 = scmp.eq.s32.totalorder %s22, 11
    %p231 = por %p229, %p230
    %p233 = scmp.ne.s32.totalorder %s218, %s232
    %p234 = scmp.eq.s32.totalorder %s22, 0
    %p235 = por %p233, %p234
    %s237 = sadd.s32 %s236, 1
    %p240 = scmp.eq.s32.totalorder %s16, 11
    %p241 = scmp.ne.s32.totalorder %s236, %s238
    %p242 = scmp.eq.s32.totalorder %s16, 0
    %p243 = por %p241, %p242
    %p244 = scmp.ne.s32.totalorder %s236, %s238
    %p245 = scmp.eq.s32.totalorder %s21, 11
    %p246 = por %p244, %p245
    %p247 = scmp.ne.s32.totalorder %s238, %s239
    %p248 = scmp.eq.s32.totalorder %s21, 0
    %p249 = por %p247, %p248
    %p250 = scmp.ne.s32.totalorder %s238, %s239
    %p251 = scmp.eq.s32.totalorder %s22, 11
    %p252 = por %p250, %p251
    %p254 = scmp.ne.s32.totalorder %s239, %s253
    %p255 = scmp.eq.s32.totalorder %s22, 0
    %p256 = por %p254, %p255
    %s257 = ssub.s32 %s24, %s31
    %s258 = ssub.s32 %s23, %s35
    %s259 = sor.u32 %s257, %s258
    %p260 = scmp.eq.s32.totalorder %s259, 0
    %s262 = sadd.s32 %s261, 1
    %s263 = scalar_select %p260, %s261, %s262
    %p266 = pneg %p260
    %p267 = scmp.eq.s32.totalorder %s16, 11
    %p268 = por %p266, %p267
    %p269 = scmp.ne.s32.totalorder %s261, %s264
    %p270 = scmp.eq.s32.totalorder %s16, 0
    %p271 = por %p269, %p270
    %p272 = scmp.ne.s32.totalorder %s261, %s264
    %p273 = scmp.eq.s32.totalorder %s21, 11
    %p274 = por %p272, %p273
    %p275 = scmp.ne.s32.totalorder %s264, %s265
    %p276 = scmp.eq.s32.totalorder %s21, 0
    %p277 = por %p275, %p276
    %p278 = scmp.ne.s32.totalorder %s264, %s265
    %p279 = scmp.eq.s32.totalorder %s22, 11
    %p280 = por %p278, %p279
    %p282 = scmp.ne.s32.totalorder %s265, %s281
    %p283 = scmp.eq.s32.totalorder %s22, 0
    %p284 = por %p282, %p283
    %p285 = scmp.le.s32.totalorder 1, %s16
    %p286 = scmp.lt.s32.totalorder %s16, 13
    %p287 = pnand %p285, %p286
    %p288 = pneg %p287
    // Predicated region
    $region9: #{forward.1} parent=5 // pred_check
      _
    $region10: #{forward.1} parent=5 // pred_check_branch
      %290 = sbr.rel (%p287) target = $region12
    $region11: #{forward.1} parent=5 // pred_region
      %s291 = ssub.s32 %s16, 1
      // Predicated region
      $region13: #{forward.1} parent=11 // pred_check
        %p292 = pneg %p81
      $region14: #{forward.1} parent=11 // pred_check_branch
        %294 = sbr.rel (%p292) target = $region16
      $region15: #{forward.1} parent=11 // pred_region
        _
      $region16: #{forward.1} parent=11 // pred_fallthru
        _
      // Predicated region
      $region17: #{forward.1} parent=11 // pred_check
        %p295 = pneg %p102
      $region18: #{forward.1} parent=11 // pred_check_branch
        %297 = sbr.rel (%p295) target = $region20
      $region19: #{forward.1} parent=11 // pred_region
        _
      $region20: #{forward.1} parent=11 // pred_fallthru
        _
      // Predicated region
      $region21: #{forward.1} parent=11 // pred_check
        %p298 = pneg %p123
      $region22: #{forward.1} parent=11 // pred_check_branch
        %300 = sbr.rel (%p298) target = $region24
      $region23: #{forward.1} parent=11 // pred_region
        _
      $region24: #{forward.1} parent=11 // pred_fallthru
        _
      // Predicated region
      $region25: #{forward.1} parent=11 // pred_check
        %p301 = pneg %p144
      $region26: #{forward.1} parent=11 // pred_check_branch
        %303 = sbr.rel (%p301) target = $region28
      $region27: #{forward.1} parent=11 // pred_region
        _
      $region28: #{forward.1} parent=11 // pred_fallthru
        _
      // Predicated region
      $region29: #{forward.1} parent=11 // pred_check
        %p304 = pneg %p165
      $region30: #{forward.1} parent=11 // pred_check_branch
        %306 = sbr.rel (%p304) target = $region32
      $region31: #{forward.1} parent=11 // pred_region
        _
      $region32: #{forward.1} parent=11 // pred_fallthru
        _
      // Predicated region
      $region33: #{forward.1} parent=11 // pred_check
        %p307 = pneg %p186
      $region34: #{forward.1} parent=11 // pred_check_branch
        %309 = sbr.rel (%p307) target = $region36
      $region35: #{forward.1} parent=11 // pred_region
        _
      $region36: #{forward.1} parent=11 // pred_fallthru
        _
      // Predicated region
      $region37: #{forward.1} parent=11 // pred_check
        %p310 = pneg %p207
      $region38: #{forward.1} parent=11 // pred_check_branch
        %312 = sbr.rel (%p310) target = $region40
      $region39: #{forward.1} parent=11 // pred_region
        _
      $region40: #{forward.1} parent=11 // pred_fallthru
        _
      // Predicated region
      $region41: #{forward.1} parent=11 // pred_check
        %p313 = pneg %p228
      $region42: #{forward.1} parent=11 // pred_check_branch
        %315 = sbr.rel (%p313) target = $region44
      $region43: #{forward.1} parent=11 // pred_region
        _
      $region44: #{forward.1} parent=11 // pred_fallthru
        _
      // Predicated region
      $region45: #{forward.1} parent=11 // pred_check
        %p316 = pneg %p249
      $region46: #{forward.1} parent=11 // pred_check_branch
        %318 = sbr.rel (%p316) target = $region48
      $region47: #{forward.1} parent=11 // pred_region
        _
      $region48: #{forward.1} parent=11 // pred_fallthru
        _
    $region12: #{forward.1} parent=5 // pred_fallthru
      _
    %p319 = scmp.lt.s32.totalorder %s16, 12
    // Predicated region
    $region49: #{forward.1} parent=5 // pred_check
      %p320 = pneg %p319
    $region50: #{forward.1} parent=5 // pred_check_branch
      %322 = sbr.rel (%p320) target = $region52
    $region51: #{forward.1} parent=5 // pred_region
      // Predicated region
      $region53: #{forward.1} parent=51 // pred_check
        %p323 = pneg %p54
      $region54: #{forward.1} parent=51 // pred_check_branch
        %325 = sbr.rel (%p323) target = $region56
      $region55: #{forward.1} parent=51 // pred_region
        %p326 = scmp.lt.s32.totalorder %s24, 2
        %s327 = scalar_select %p326, %s24, 2
        %s328 = smul.u32 8, %s23
        %p329 = scmp.lt.s32.totalorder %s327, 2
        %s330 = scalar_select %p329, %s327, 2
        %p331 = scmp.lt.s32.totalorder %s328, 15
        %s332 = scalar_select %p331, %s328, 15
        %s333 = smul.addr %s330, 16
        %s334 = sadd.s32 %s332, %s333
        %s335 = smul.addr %s334, 8
        %s336 = scalar_lea.vmem %s0, %s335
        %p337 = scmp.lt.s32.totalorder %s24, 2
        %s338 = scalar_select %p337, %s24, 2
        %s339 = smul.u32 8, %s23
      $region56: #{forward.1} parent=51 // pred_fallthru
        _
    $region52: #{forward.1} parent=5 // pred_fallthru
      _
    %p340 = scmp.le.s32.totalorder 1, %s16
    %p341 = scmp.lt.s32.totalorder %s16, 13
    %p342 = pnand %p340, %p341
    %p343 = pneg %p342
    // Predicated region
    $region57: #{forward.1} parent=5 // pred_check
      _
    $region58: #{forward.1} parent=5 // pred_check_branch
      %345 = sbr.rel (%p342) target = $region60
    $region59: #{forward.1} parent=5 // pred_region
      %s346 = ssub.s32 %s16, 1
      %p347 = scmp.lt.s32.totalorder %s26, 2
      %s348 = scalar_select %p347, %s26, 2
      %s349 = smul.u32 8, %s25
      %p350 = scmp.lt.s32.totalorder %s348, 2
      %s351 = scalar_select %p350, %s348, 2
      %p352 = scmp.lt.s32.totalorder %s349, 15
      %s353 = scalar_select %p352, %s349, 15
      %s354 = smul.addr %s351, 16
      %s355 = sadd.s32 %s353, %s354
      %s356 = smul.addr %s355, 8
      %s357 = scalar_lea.vmem %s0, %s356
      %p358 = pneg %p60
      %p359 = pneg %p57
      %p360 = pneg %p81
      %p361 = pneg %p78
      %p362 = pneg %p102
      %p363 = pneg %p99
      %p364 = pneg %p123
      %p365 = pneg %p120
      %p366 = pneg %p144
      %p367 = pneg %p141
      %p368 = pneg %p165
      %p369 = pneg %p162
      %p370 = pneg %p186
      %p371 = pneg %p183
      %p372 = pneg %p207
      %p373 = pneg %p204
      %p374 = pneg %p228
      %p375 = pneg %p225
      %p376 = pneg %p249
      %p377 = pneg %p246
      %p378 = pneg %p277
      %p379 = pneg %p274
      %s380 = smul.u32 8, %s25
      %p381 = scmp.lt.s32.totalorder %s26, 5
      %s382 = scalar_select %p381, %s26, 5
      %p383 = scmp.lt.s32.totalorder %s380, 15
      %s384 = scalar_select %p383, %s380, 15
      %s385 = smul.addr %s382, 16
      %s386 = sadd.s32 %s384, %s385
      %s387 = smul.addr %s386, 8
      %s388 = scalar_lea.vmem %s10, %s387
      %p389 = scmp.lt.s32.totalorder %s26, 2
      %s390 = scalar_select %p389, %s26, 2
      %s391 = smul.u32 8, %s25
      %p392 = scmp.lt.s32.totalorder %s390, 2
      %s393 = scalar_select %p392, %s390, 2
      %p394 = scmp.lt.s32.totalorder %s391, 15
      %s395 = scalar_select %p394, %s391, 15
      %s396 = smul.addr %s393, 16
      %s397 = sadd.s32 %s395, %s396
      %s398 = smul.addr %s397, 8
      %s399 = scalar_lea.vmem %s0, %s398
      %p400 = scmp.lt.s32.totalorder %s26, 2
      %s401 = scalar_select %p400, %s26, 2
      %s402 = smul.u32 8, %s25
      %s403 = smul.u32 8, %s25
      %p404 = scmp.lt.s32.totalorder %s26, 5
      %s405 = scalar_select %p404, %s26, 5
      %p406 = scmp.lt.s32.totalorder %s403, 15
      %s407 = scalar_select %p406, %s403, 15
      %s408 = smul.addr %s405, 16
      %s409 = sadd.s32 %s407, %s408
      %s410 = smul.addr %s409, 8
      %s411 = scalar_lea.vmem %s10, %s410
      %s412 = smul.u32 8, %s25
      %p414 = scmp.eq.s32.totalorder %s26, 0
      // Predicated region
      $region61: #{forward.1} parent=59 // pred_check
        %p415 = pneg %p414
      $region62: #{forward.1} parent=59 // pred_check_branch
        %417 = sbr.rel (%p415) target = $region64
      $region63: #{forward.1} parent=59 // pred_region
        %vm418 = vcmask 523264
        %419 = vst.msk [vmem:[#allocation2] sm:$0xff] %vm418, 0.0
        %420 = vst.msk [vmem:[#allocation2 + $0x8] sm:$0xff] %vm418, 0.0
        %421 = vst.msk [vmem:[#allocation2 + $0x10] sm:$0xff] %vm418, 0.0
        %422 = vst.msk [vmem:[#allocation2 + $0x18] sm:$0xff] %vm418, 0.0
        %423 = vst.msk [vmem:[#allocation2 + $0x20] sm:$0xff] %vm418, 0.0
        %424 = vst.msk [vmem:[#allocation2 + $0x28] sm:$0xff] %vm418, 0.0
        %425 = vst.msk [vmem:[#allocation2 + $0x30] sm:$0xff] %vm418, 0.0
        %426 = vst.msk [vmem:[#allocation2 + $0x38] sm:$0xff] %vm418, 0.0
        %vm427 = vcmask 261120
        %428 = vst.msk [vmem:[#allocation3] sm:$0xff] %vm427, 0.0
        %429 = vst.msk [vmem:[#allocation3 + $0x8] sm:$0xff] %vm427, 0.0
        %430 = vst.msk [vmem:[#allocation3 + $0x10] sm:$0xff] %vm427, 0.0
        %431 = vst.msk [vmem:[#allocation3 + $0x18] sm:$0xff] %vm427, 0.0
        %432 = vst.msk [vmem:[#allocation3 + $0x20] sm:$0xff] %vm427, 0.0
        %433 = vst.msk [vmem:[#allocation3 + $0x28] sm:$0xff] %vm427, 0.0
        %434 = vst.msk [vmem:[#allocation3 + $0x30] sm:$0xff] %vm427, 0.0
        %435 = vst.msk [vmem:[#allocation3 + $0x38] sm:$0xff] %vm427, 0.0
        %436 = vst.msk [vmem:[#allocation4] sm:$0xff] %vm427, 0.0
        %437 = vst.msk [vmem:[#allocation4 + $0x8] sm:$0xff] %vm427, 0.0
        %438 = vst.msk [vmem:[#allocation4 + $0x10] sm:$0xff] %vm427, 0.0
        %439 = vst.msk [vmem:[#allocation4 + $0x18] sm:$0xff] %vm427, 0.0
        %440 = vst.msk [vmem:[#allocation4 + $0x20] sm:$0xff] %vm427, 0.0
        %441 = vst.msk [vmem:[#allocation4 + $0x28] sm:$0xff] %vm427, 0.0
        %442 = vst.msk [vmem:[#allocation4 + $0x30] sm:$0xff] %vm427, 0.0
        %443 = vst.msk [vmem:[#allocation4 + $0x38] sm:$0xff] %vm427, 0.0
      $region64: #{forward.1} parent=59 // pred_fallthru
        _
      %p444 = scmp.lt.s32.totalorder %s26, 3
      %v445 = vld [vmem:[%s399] sm:$0xff]
      %v446 = vld [vmem:[%s399 + $0x8] sm:$0xff]
      %v447 = vld [vmem:[%s399 + $0x10] sm:$0xff]
      %v448 = vld [vmem:[%s399 + $0x18] sm:$0xff]
      %v449 = vld [vmem:[%s399 + $0x20] sm:$0xff]
      %v450 = vld [vmem:[%s399 + $0x28] sm:$0xff]
      %v451 = vld [vmem:[%s399 + $0x30] sm:$0xff]
      %v452 = vld [vmem:[%s399 + $0x38] sm:$0xff]
      %v453 = vld [vmem:[#allocation4] sm:$0xff]
      %v454 = vld [vmem:[#allocation4 + $0x8] sm:$0xff]
      %v455 = vld [vmem:[#allocation4 + $0x10] sm:$0xff]
      %v456 = vld [vmem:[#allocation4 + $0x18] sm:$0xff]
      %v457 = vld [vmem:[#allocation4 + $0x20] sm:$0xff]
      %v458 = vld [vmem:[#allocation4 + $0x28] sm:$0xff]
      %v459 = vld [vmem:[#allocation4 + $0x30] sm:$0xff]
      %v460 = vld [vmem:[#allocation4 + $0x38] sm:$0xff]
      %s461 = scalar_select %p444, 1, 0
      %v462 = vstv %s461
      %vm463 = vcmp.eq.s32.totalorder %v462, 1
      %v464 = vsel %vm463, %v445, %v453
      %v465 = vsel %vm463, %v446, %v454
      %v466 = vsel %vm463, %v447, %v455
      %v467 = vsel %vm463, %v448, %v456
      %v468 = vsel %vm463, %v449, %v457
      %v469 = vsel %vm463, %v450, %v458
      %v470 = vsel %vm463, %v451, %v459
      %v471 = vsel %vm463, %v452, %v460
      %vm472 = vcmask 261120
      %473 = vst.msk [vmem:[#allocation2] sm:$0xff] %vm472, %v464
      %474 = vst.msk [vmem:[#allocation2 + $0x8] sm:$0xff] %vm472, %v465
      %475 = vst.msk [vmem:[#allocation2 + $0x10] sm:$0xff] %vm472, %v466
      %476 = vst.msk [vmem:[#allocation2 + $0x18] sm:$0xff] %vm472, %v467
      %477 = vst.msk [vmem:[#allocation2 + $0x20] sm:$0xff] %vm472, %v468
      %478 = vst.msk [vmem:[#allocation2 + $0x28] sm:$0xff] %vm472, %v469
      %479 = vst.msk [vmem:[#allocation2 + $0x30] sm:$0xff] %vm472, %v470
      %480 = vst.msk [vmem:[#allocation2 + $0x38] sm:$0xff] %vm472, %v471
      %v481 = vld [vmem:[#allocation2] sm:$0xff]
      %v482 = vld [vmem:[#allocation2 + $0x8] sm:$0xff]
      %v483 = vld [vmem:[#allocation2 + $0x10] sm:$0xff]
      %v484 = vld [vmem:[#allocation2 + $0x18] sm:$0xff]
      %v485 = vld [vmem:[#allocation2 + $0x20] sm:$0xff]
      %v486 = vld [vmem:[#allocation2 + $0x28] sm:$0xff]
      %v487 = vld [vmem:[#allocation2 + $0x30] sm:$0xff]
      %v488 = vld [vmem:[#allocation2 + $0x38] sm:$0xff]
      %v489 = vpack.c.bf16 %v482, %v481
      %v490 = vpack.c.bf16 %v484, %v483
      %v491 = vpack.c.bf16 %v486, %v485
      %v492 = vpack.c.bf16 %v488, %v487
      %v493 = vld [vmem:[%s3] sm:$0xf]
      %v494 = vld [vmem:[%s3 + $0x4] sm:$0xf]
      %v495 = vld [vmem:[%s3 + $0x8] sm:$0xf]
      %v496 = vld [vmem:[%s3 + $0xc] sm:$0xf]
      %v497 = vld [vmem:[%s3 + $0x10] sm:$0xf]
      %v498 = vld [vmem:[%s3 + $0x14] sm:$0xf]
      %v499 = vld [vmem:[%s3 + $0x18] sm:$0xf]
      %v500 = vld [vmem:[%s3 + $0x1c] sm:$0xf]
      %v501 = vld [vmem:[%s4] sm:$0x1]
      %v503 = vlaneseq
      %v504 = vshrl.u32 %v503, 7
      %v505 = vsub.s32 0, %v504
      %v506 = vrot.slane %v501, %v505
      %v516 = vunpack.c.l.b16 %v493
      %v517 = vunpack.c.l.b16 %v494
      %v518 = vunpack.c.l.b16 %v495
      %v519 = vunpack.c.l.b16 %v496
      %v520 = vunpack.c.l.b16 %v497
      %v521 = vunpack.c.l.b16 %v498
      %v522 = vunpack.c.l.b16 %v499
      %v523 = vunpack.c.l.b16 %v500
      %v524 = vpack.c.b16 %v517, %v516
      %v525 = vpack.c.b16 %v519, %v518
      %v526 = vpack.c.b16 %v521, %v520
      %v527 = vpack.c.b16 %v523, %v522
      %vm532 = vcmask 523264
      %v534 = vsel %vm532, %v489, 0
      %v537 = vsel %vm532, %v490, 0
      %v540 = vsel %vm532, %v491, 0
      %v543 = vsel %vm532, %v492, 0
      %545 = vmatprep.subr.bf16.mxu0 0
      %546 = vmatpush1.bf16.msra.mxu0 %v524
      %547 = vmatprep.subr.bf16.mxu0 0
      %548 = vmatpush1.bf16.msra.mxu0 %v525
      %549 = vmatprep.subr.bf16.mxu0 0
      %550 = vmatpush1.bf16.msra.mxu0 %v526
      %551 = vmatprep.subr.bf16.mxu0 0
      %552 = vmatpush1.bf16.msra.mxu0 %v527
      %553 = vmatprep.subr.bf16.mxu0 0
      %554 = vmatpush1.bf16.msra.mxu0 0
      %555 = vmatprep.subr.bf16.mxu0 0
      %556 = vmatpush1.bf16.msra.mxu0 0
      %557 = vmatprep.subr.bf16.mxu0 0
      %558 = vmatpush1.bf16.msra.mxu0 0
      %559 = vmatprep.subr.bf16.mxu0 0
      %560 = vmatpush1.bf16.msra.mxu0 0
      %561 = vmatprep.subr.bf16.mxu0 0
      %562 = vmatpush1.bf16.msra.mxu0 0
      %563 = vmatprep.subr.bf16.mxu0 0
      %564 = vmatpush1.bf16.msra.mxu0 0
      %565 = vmatprep.subr.bf16.mxu0 0
      %566 = vmatpush1.bf16.msra.mxu0 0
      %567 = vmatprep.subr.bf16.mxu0 0
      %568 = vmatpush1.bf16.msra.mxu0 0
      %569 = vmatprep.subr.bf16.mxu0 0
      %570 = vmatpush1.bf16.msra.mxu0 0
      %571 = vmatprep.subr.bf16.mxu0 0
      %572 = vmatpush1.bf16.msra.mxu0 0
      %573 = vmatprep.subr.bf16.mxu0 0
      %574 = vmatpush1.bf16.msra.mxu0 0
      %575 = vmatprep.subr.bf16.mxu0 0
      %576 = vmatpush1.bf16.msra.mxu0 0
      %577 = vmatprep.mubr.bf16.mxu0 0
      %578 = vmatmul.mubr.bf16.gmra.mrb[0].mxu0 %v534
      %v579 = vpop.f32.mrb[0].mxu0
      %v580 = vadd.f32 %v506, %v579
      %v581 = vpop.f32.mrb[0].mxu0
      %v582 = vpop.f32.mrb[0].mxu0
      %v583 = vadd.f32 %v506, %v582
      %v584 = vpop.f32.mrb[0].mxu0
      %585 = vmatprep.mubr.bf16.mxu0 0
      %586 = vmatmul.mubr.bf16.gmra.mrb[0].mxu0 %v537
      %v587 = vpop.f32.mrb[0].mxu0
      %v588 = vadd.f32 %v506, %v587
      %v589 = vpop.f32.mrb[0].mxu0
      %v590 = vpop.f32.mrb[0].mxu0
      %v591 = vadd.f32 %v506, %v590
      %v592 = vpop.f32.mrb[0].mxu0
      %593 = vmatprep.mubr.bf16.mxu0 0
      %594 = vmatmul.mubr.bf16.gmra.mrb[0].mxu0 %v540
      %v595 = vpop.f32.mrb[0].mxu0
      %v596 = vadd.f32 %v506, %v595
      %v597 = vpop.f32.mrb[0].mxu0
      %v598 = vpop.f32.mrb[0].mxu0
      %v599 = vadd.f32 %v506, %v598
      %v600 = vpop.f32.mrb[0].mxu0
      %601 = vmatprep.mubr.bf16.mxu0 0
      %602 = vmatmul.mubr.bf16.gmra.mrb[0].mxu0 %v543
      %v603 = vpop.f32.mrb[0].mxu0
      %v604 = vadd.f32 %v506, %v603
      %v605 = vpop.f32.mrb[0].mxu0
      %v606 = vpop.f32.mrb[0].mxu0
      %v607 = vadd.f32 %v506, %v606
      %v608 = vpop.f32.mrb[0].mxu0
      %609 = vdwg.mxu0
      %v610 = vxor.u32 %v580, 2147483648
      %v611 = vxor.u32 %v583, 2147483648
      %v612 = vxor.u32 %v588, 2147483648
      %v613 = vxor.u32 %v591, 2147483648
      %v614 = vxor.u32 %v596, 2147483648
      %v615 = vxor.u32 %v599, 2147483648
      %v616 = vxor.u32 %v604, 2147483648
      %v617 = vxor.u32 %v607, 2147483648
      %v618 = vmul.f32 %v610, 1.442695
      %v619 = vpow.pop %v618
      %v620 = vmul.f32 %v611, 1.442695
      %v621 = vpow.pop %v620
      %v622 = vmul.f32 %v612, 1.442695
      %v623 = vpow.pop %v622
      %v624 = vmul.f32 %v613, 1.442695
      %v625 = vpow.pop %v624
      %v626 = vmul.f32 %v614, 1.442695
      %v627 = vpow.pop %v626
      %v628 = vmul.f32 %v615, 1.442695
      %v629 = vpow.pop %v628
      %v630 = vmul.f32 %v616, 1.442695
      %v631 = vpow.pop %v630
      %v632 = vmul.f32 %v617, 1.442695
      %v633 = vpow.pop %v632
      %v634 = vadd.f32 %v619, 1.0
      %v635 = vadd.f32 %v621, 1.0
      %v636 = vadd.f32 %v623, 1.0
      %v637 = vadd.f32 %v625, 1.0
      %v638 = vadd.f32 %v627, 1.0
      %v639 = vadd.f32 %v629, 1.0
      %v640 = vadd.f32 %v631, 1.0
      %v641 = vadd.f32 %v633, 1.0
      %v642 = vrcp.pop %v634
      %v643 = vmul.f32 1.0, %v642
      %v644 = vrcp.pop %v635
      %v645 = vmul.f32 1.0, %v644
      %v646 = vrcp.pop %v636
      %v647 = vmul.f32 1.0, %v646
      %v648 = vrcp.pop %v637
      %v649 = vmul.f32 1.0, %v648
      %v650 = vrcp.pop %v638
      %v651 = vmul.f32 1.0, %v650
      %v652 = vrcp.pop %v639
      %v653 = vmul.f32 1.0, %v652
      %v654 = vrcp.pop %v640
      %v655 = vmul.f32 1.0, %v654
      %v656 = vrcp.pop %v641
      %v657 = vmul.f32 1.0, %v656
      %v658 = vtanh.pop %v580
      %v659 = vtanh.pop %v583
      %v660 = vtanh.pop %v588
      %v661 = vtanh.pop %v591
      %v662 = vtanh.pop %v596
      %v663 = vtanh.pop %v599
      %v664 = vtanh.pop %v604
      %v665 = vtanh.pop %v607
      %v666 = vld [vmem:[#allocation3] sm:$0xff]
      %v667 = vld [vmem:[#allocation3 + $0x8] sm:$0xff]
      %v668 = vld [vmem:[#allocation3 + $0x10] sm:$0xff]
      %v669 = vld [vmem:[#allocation3 + $0x18] sm:$0xff]
      %v670 = vld [vmem:[#allocation3 + $0x20] sm:$0xff]
      %v671 = vld [vmem:[#allocation3 + $0x28] sm:$0xff]
      %v672 = vld [vmem:[#allocation3 + $0x30] sm:$0xff]
      %v673 = vld [vmem:[#allocation3 + $0x38] sm:$0xff]
      %682 = vrot.lane.b32.xlu0 %v666, 32
      %v683 = vpop.permute.xlu0 %682
      %684 = vrot.lane.b32.xlu0 %v667, 32
      %v685 = vpop.permute.xlu0 %684
      %686 = vrot.lane.b32.xlu0 %v668, 32
      %v687 = vpop.permute.xlu0 %686
      %688 = vrot.lane.b32.xlu0 %v669, 32
      %v689 = vpop.permute.xlu0 %688
      %690 = vrot.lane.b32.xlu0 %v670, 32
      %v691 = vpop.permute.xlu0 %690
      %692 = vrot.lane.b32.xlu0 %v671, 32
      %v693 = vpop.permute.xlu0 %692
      %694 = vrot.lane.b32.xlu0 %v672, 32
      %v695 = vpop.permute.xlu0 %694
      %696 = vrot.lane.b32.xlu0 %v673, 32
      %v697 = vpop.permute.xlu0 %696
      %v706 = vmul.f32 %v643, %v683
      %v707 = vmul.f32 %v645, %v685
      %v708 = vmul.f32 %v647, %v687
      %v709 = vmul.f32 %v649, %v689
      %v710 = vmul.f32 %v651, %v691
      %v711 = vmul.f32 %v653, %v693
      %v712 = vmul.f32 %v655, %v695
      %v713 = vmul.f32 %v657, %v697
      %722 = vrot.lane.b32.xlu0 %v658, 64
      %v723 = vpop.permute.xlu0 %722
      %724 = vrot.lane.b32.xlu0 %v659, 64
      %v725 = vpop.permute.xlu0 %724
      %726 = vrot.lane.b32.xlu0 %v660, 64
      %v727 = vpop.permute.xlu0 %726
      %728 = vrot.lane.b32.xlu0 %v661, 64
      %v729 = vpop.permute.xlu0 %728
      %730 = vrot.lane.b32.xlu0 %v662, 64
      %v731 = vpop.permute.xlu0 %730
      %732 = vrot.lane.b32.xlu0 %v663, 64
      %v733 = vpop.permute.xlu0 %732
      %734 = vrot.lane.b32.xlu0 %v664, 64
      %v735 = vpop.permute.xlu0 %734
      %736 = vrot.lane.b32.xlu0 %v665, 64
      %v737 = vpop.permute.xlu0 %736
      %v746 = vmul.f32 %v643, %v723
      %v747 = vmul.f32 %v645, %v725
      %v748 = vmul.f32 %v647, %v727
      %v749 = vmul.f32 %v649, %v729
      %v750 = vmul.f32 %v651, %v731
      %v751 = vmul.f32 %v653, %v733
      %v752 = vmul.f32 %v655, %v735
      %v753 = vmul.f32 %v657, %v737
      %762 = vrot.lane.b32.xlu0 %v746, 32
      %v763 = vpop.permute.xlu0 %762
      %764 = vrot.lane.b32.xlu0 %v747, 32
      %v765 = vpop.permute.xlu0 %764
      %766 = vrot.lane.b32.xlu0 %v748, 32
      %v767 = vpop.permute.xlu0 %766
      %768 = vrot.lane.b32.xlu0 %v749, 32
      %v769 = vpop.permute.xlu0 %768
      %770 = vrot.lane.b32.xlu0 %v750, 32
      %v771 = vpop.permute.xlu0 %770
      %772 = vrot.lane.b32.xlu0 %v751, 32
      %v773 = vpop.permute.xlu0 %772
      %774 = vrot.lane.b32.xlu0 %v752, 32
      %v775 = vpop.permute.xlu0 %774
      %776 = vrot.lane.b32.xlu0 %v753, 32
      %v777 = vpop.permute.xlu0 %776
      %v786 = vadd.f32 %v706, %v763
      %v787 = vadd.f32 %v707, %v765
      %v788 = vadd.f32 %v708, %v767
      %v789 = vadd.f32 %v709, %v769
      %v790 = vadd.f32 %v710, %v771
      %v791 = vadd.f32 %v711, %v773
      %v792 = vadd.f32 %v712, %v775
      %v793 = vadd.f32 %v713, %v777
      %v794 = vtanh.pop %v786
      %v795 = vtanh.pop %v787
      %v796 = vtanh.pop %v788
      %v797 = vtanh.pop %v789
      %v798 = vtanh.pop %v790
      %v799 = vtanh.pop %v791
      %v800 = vtanh.pop %v792
      %v801 = vtanh.pop %v793
      %810 = vrot.lane.b32.xlu0 %v794, 64
      %v811 = vpop.permute.xlu0 %810
      %812 = vrot.lane.b32.xlu0 %v795, 64
      %v813 = vpop.permute.xlu0 %812
      %814 = vrot.lane.b32.xlu0 %v796, 64
      %v815 = vpop.permute.xlu0 %814
      %816 = vrot.lane.b32.xlu0 %v797, 64
      %v817 = vpop.permute.xlu0 %816
      %818 = vrot.lane.b32.xlu0 %v798, 64
      %v819 = vpop.permute.xlu0 %818
      %820 = vrot.lane.b32.xlu0 %v799, 64
      %v821 = vpop.permute.xlu0 %820
      %822 = vrot.lane.b32.xlu0 %v800, 64
      %v823 = vpop.permute.xlu0 %822
      %824 = vrot.lane.b32.xlu0 %v801, 64
      %v825 = vpop.permute.xlu0 %824
      %v834 = vmul.f32 %v643, %v811
      %v835 = vmul.f32 %v645, %v813
      %v836 = vmul.f32 %v647, %v815
      %v837 = vmul.f32 %v649, %v817
      %v838 = vmul.f32 %v651, %v819
      %v839 = vmul.f32 %v653, %v821
      %v840 = vmul.f32 %v655, %v823
      %v841 = vmul.f32 %v657, %v825
      %850 = vrot.lane.b32.xlu0 %v786, 96
      %v851 = vpop.permute.xlu0 %850
      %852 = vrot.lane.b32.xlu0 %v787, 96
      %v853 = vpop.permute.xlu0 %852
      %854 = vrot.lane.b32.xlu0 %v788, 96
      %v855 = vpop.permute.xlu0 %854
      %856 = vrot.lane.b32.xlu0 %v789, 96
      %v857 = vpop.permute.xlu0 %856
      %858 = vrot.lane.b32.xlu0 %v790, 96
      %v859 = vpop.permute.xlu0 %858
      %860 = vrot.lane.b32.xlu0 %v791, 96
      %v861 = vpop.permute.xlu0 %860
      %862 = vrot.lane.b32.xlu0 %v792, 96
      %v863 = vpop.permute.xlu0 %862
      %864 = vrot.lane.b32.xlu0 %v793, 96
      %v865 = vpop.permute.xlu0 %864
      %874 = vst.msk [vmem:[#allocation3] sm:$0xff] %vm472, %v851
      %875 = vst.msk [vmem:[#allocation3 + $0x8] sm:$0xff] %vm472, %v853
      %876 = vst.msk [vmem:[#allocation3 + $0x10] sm:$0xff] %vm472, %v855
      %877 = vst.msk [vmem:[#allocation3 + $0x18] sm:$0xff] %vm472, %v857
      %878 = vst.msk [vmem:[#allocation3 + $0x20] sm:$0xff] %vm472, %v859
      %879 = vst.msk [vmem:[#allocation3 + $0x28] sm:$0xff] %vm472, %v861
      %880 = vst.msk [vmem:[#allocation3 + $0x30] sm:$0xff] %vm472, %v863
      %881 = vst.msk [vmem:[#allocation3 + $0x38] sm:$0xff] %vm472, %v865
      %v882 = vpack.c.bf16 %v835, %v834
      %v883 = vpack.c.bf16 %v837, %v836
      %v884 = vpack.c.bf16 %v839, %v838
      %v885 = vpack.c.bf16 %v841, %v840
      %v886 = vld [vmem:[%s5] sm:$0xf]
      %v887 = vld [vmem:[%s5 + $0x4] sm:$0xf]
      %v888 = vld [vmem:[%s5 + $0x8] sm:$0xf]
      %v889 = vld [vmem:[%s5 + $0xc] sm:$0xf]
      %v890 = vld [vmem:[%s6] sm:$0xff]
      %v891 = vld [vmem:[%s6 + $0x8] sm:$0xff]
      %v892 = vld [vmem:[%s6 + $0x10] sm:$0xff]
      %v893 = vld [vmem:[%s6 + $0x18] sm:$0xff]
      %v894 = vld [vmem:[%s6 + $0x20] sm:$0xff]
      %v895 = vld [vmem:[%s6 + $0x28] sm:$0xff]
      %v896 = vld [vmem:[%s6 + $0x30] sm:$0xff]
      %v897 = vld [vmem:[%s6 + $0x38] sm:$0xff]
      %902 = vrot.lane.b32.xlu0 %v882, 32
      %v903 = vpop.permute.xlu0 %902
      %904 = vrot.lane.b32.xlu0 %v883, 32
      %v905 = vpop.permute.xlu0 %904
      %906 = vrot.lane.b32.xlu0 %v884, 32
      %v907 = vpop.permute.xlu0 %906
      %908 = vrot.lane.b32.xlu0 %v885, 32
      %v909 = vpop.permute.xlu0 %908
      %v914 = vunpack.c.l.b16 %v886
      %v915 = vunpack.c.l.b16 %v887
      %v916 = vunpack.c.l.b16 %v888
      %v917 = vunpack.c.l.b16 %v889
      %v918 = vpack.c.b16 %v915, %v914
      %v919 = vpack.c.b16 %v917, %v916
      %v923 = vsel %vm472, %v903, 0
      %v926 = vsel %vm472, %v905, 0
      %v929 = vsel %vm472, %v907, 0
      %v932 = vsel %vm472, %v909, 0
      %934 = vmatprep.subr.bf16.mxu0 0
      %935 = vmatpush1.bf16.msra.mxu0 %v918
      %936 = vmatprep.subr.bf16.mxu0 0
      %937 = vmatpush1.bf16.msra.mxu0 %v919
      %938 = vmatprep.subr.bf16.mxu0 0
      %939 = vmatpush1.bf16.msra.mxu0 0
      %940 = vmatprep.subr.bf16.mxu0 0
      %941 = vmatpush1.bf16.msra.mxu0 0
      %942 = vmatprep.subr.bf16.mxu0 0
      %943 = vmatpush1.bf16.msra.mxu0 0
      %944 = vmatprep.subr.bf16.mxu0 0
      %945 = vmatpush1.bf16.msra.mxu0 0
      %946 = vmatprep.subr.bf16.mxu0 0
      %947 = vmatpush1.bf16.msra.mxu0 0
      %948 = vmatprep.subr.bf16.mxu0 0
      %949 = vmatpush1.bf16.msra.mxu0 0
      %950 = vmatprep.subr.bf16.mxu0 0
      %951 = vmatpush1.bf16.msra.mxu0 0
      %952 = vmatprep.subr.bf16.mxu0 0
      %953 = vmatpush1.bf16.msra.mxu0 0
      %954 = vmatprep.subr.bf16.mxu0 0
      %955 = vmatpush1.bf16.msra.mxu0 0
      %956 = vmatprep.subr.bf16.mxu0 0
      %957 = vmatpush1.bf16.msra.mxu0 0
      %958 = vmatprep.subr.bf16.mxu0 0
      %959 = vmatpush1.bf16.msra.mxu0 0
      %960 = vmatprep.subr.bf16.mxu0 0
      %961 = vmatpush1.bf16.msra.mxu0 0
      %962 = vmatprep.subr.bf16.mxu0 0
      %963 = vmatpush1.bf16.msra.mxu0 0
      %964 = vmatprep.subr.bf16.mxu0 0
      %965 = vmatpush1.bf16.msra.mxu0 0
      %966 = vmatprep.mubr.bf16.mxu0 0
      %967 = vmatmul.mubr.bf16.gmra.mrb[0].mxu0 %v923
      %v968 = vpop.f32.mrb[0].mxu0
      %v969 = vadd.f32 %v890, %v968
      %v970 = vpop.f32.mrb[0].mxu0
      %v971 = vpop.f32.mrb[0].mxu0
      %v972 = vadd.f32 %v891, %v971
      %v973 = vpop.f32.mrb[0].mxu0
      %974 = vmatprep.mubr.bf16.mxu0 0
      %975 = vmatmul.mubr.bf16.gmra.mrb[0].mxu0 %v926
      %v976 = vpop.f32.mrb[0].mxu0
      %v977 = vadd.f32 %v892, %v976
      %v978 = vpop.f32.mrb[0].mxu0
      %v979 = vpop.f32.mrb[0].mxu0
      %v980 = vadd.f32 %v893, %v979
      %v981 = vpop.f32.mrb[0].mxu0
      %982 = vmatprep.mubr.bf16.mxu0 0
      %983 = vmatmul.mubr.bf16.gmra.mrb[0].mxu0 %v929
      %v984 = vpop.f32.mrb[0].mxu0
      %v985 = vadd.f32 %v894, %v984
      %v986 = vpop.f32.mrb[0].mxu0
      %v987 = vpop.f32.mrb[0].mxu0
      %v988 = vadd.f32 %v895, %v987
      %v989 = vpop.f32.mrb[0].mxu0
      %990 = vmatprep.mubr.bf16.mxu0 0
      %991 = vmatmul.mubr.bf16.gmra.mrb[0].mxu0 %v932
      %v992 = vpop.f32.mrb[0].mxu0
      %v993 = vadd.f32 %v896, %v992
      %v994 = vpop.f32.mrb[0].mxu0
      %v995 = vpop.f32.mrb[0].mxu0
      %v996 = vadd.f32 %v897, %v995
      %v997 = vpop.f32.mrb[0].mxu0
      %998 = vdwg.mxu0
      %v999 = vpack.c.bf16 %v972, %v969
      %v1000 = vpack.c.bf16 %v980, %v977
      %v1001 = vpack.c.bf16 %v988, %v985
      %v1002 = vpack.c.bf16 %v996, %v993
      %v1003 = vld [vmem:[%s1] sm:$0xff]
      %v1004 = vld [vmem:[%s1 + $0x8] sm:$0xff]
      %v1005 = vld [vmem:[%s1 + $0x10] sm:$0xff]
      %v1006 = vld [vmem:[%s1 + $0x18] sm:$0xff]
      %v1007 = vld [vmem:[%s1 + $0x20] sm:$0xff]
      %v1008 = vld [vmem:[%s1 + $0x28] sm:$0xff]
      %v1009 = vld [vmem:[%s1 + $0x30] sm:$0xff]
      %v1010 = vld [vmem:[%s1 + $0x38] sm:$0xff]
      %1015 = vrot.lane.b32.xlu0 %v999, 94
      %v1016 = vpop.permute.xlu0 %1015
      %1017 = vrot.lane.b32.xlu0 %v1000, 94
      %v1018 = vpop.permute.xlu0 %1017
      %1019 = vrot.lane.b32.xlu0 %v1001, 94
      %v1020 = vpop.permute.xlu0 %1019
      %1021 = vrot.lane.b32.xlu0 %v1002, 94
      %v1022 = vpop.permute.xlu0 %1021
      %vm1023 = vcmask 277504
      %v1025 = vsel %vm1023, %v999, 0
      %v1028 = vsel %vm1023, %v1000, 0
      %v1031 = vsel %vm1023, %v1001, 0
      %v1034 = vsel %vm1023, %v1002, 0
      %v1037 = vsel %vm1023, %v1016, 0
      %v1040 = vsel %vm1023, %v1018, 0
      %v1043 = vsel %vm1023, %v1020, 0
      %v1046 = vsel %vm1023, %v1022, 0
      %1048 = vmatprep.subr.bf16.mxu0 0
      %1049 = vmatpush1.bf16.xpose.msra.mxu0 %v1037
      %1050 = vmatprep.subr.bf16.mxu0 0
      %1051 = vmatpush1.bf16.xpose.msra.mxu0 %v1040
      %1052 = vmatprep.subr.bf16.mxu0 0
      %1053 = vmatpush1.bf16.xpose.msra.mxu0 %v1043
      %1054 = vmatprep.subr.bf16.mxu0 0
      %1055 = vmatpush1.bf16.xpose.msra.mxu0 %v1046
      %1056 = vmatprep.subr.bf16.mxu0 0
      %1057 = vmatpush1.bf16.xpose.msra.mxu0 0
      %1058 = vmatprep.subr.bf16.mxu0 0
      %1059 = vmatpush1.bf16.xpose.msra.mxu0 0
      %1060 = vmatprep.subr.bf16.mxu0 0
      %1061 = vmatpush1.bf16.xpose.msra.mxu0 0
      %1062 = vmatprep.subr.bf16.mxu0 0
      %1063 = vmatpush1.bf16.xpose.msra.mxu0 0
      %1064 = vmatprep.subr.bf16.mxu0 0
      %1065 = vmatpush1.bf16.xpose.msra.mxu0 0
      %1066 = vmatprep.subr.bf16.mxu0 0
      %1067 = vmatpush1.bf16.xpose.msra.mxu0 0
      %1068 = vmatprep.subr.bf16.mxu0 0
      %1069 = vmatpush1.bf16.xpose.msra.mxu0 0
      %1070 = vmatprep.subr.bf16.mxu0 0
      %1071 = vmatpush1.bf16.xpose.msra.mxu0 0
      %1072 = vmatprep.subr.bf16.mxu0 0
      %1073 = vmatpush1.bf16.xpose.msra.mxu0 0
      %1074 = vmatprep.subr.bf16.mxu0 0
      %1075 = vmatpush1.bf16.xpose.msra.mxu0 0
      %1076 = vmatprep.subr.bf16.mxu0 0
      %1077 = vmatpush1.bf16.xpose.msra.mxu0 0
      %1078 = vmatprep.subr.bf16.mxu0 0
      %1079 = vmatpush1.bf16.xpose.msra.mxu0 0
      %1080 = vmatprep.mubr.bf16.mxu0 0
      %1081 = vmatmul.mubr.bf16.gmra.mrb[0].mxu0 %v1025
      %v1082 = vpop.f32.mrb[0].mxu0
      %v1083 = vadd.f32 %v1003, %v1082
      %v1084 = vpop.f32.mrb[0].mxu0
      %v1085 = vpop.f32.mrb[0].mxu0
      %v1086 = vadd.f32 %v1004, %v1085
      %v1087 = vpop.f32.mrb[0].mxu0
      %1088 = vmatprep.mubr.bf16.mxu0 0
      %1089 = vmatmul.mubr.bf16.gmra.mrb[0].mxu0 %v1028
      %v1090 = vpop.f32.mrb[0].mxu0
      %v1091 = vadd.f32 %v1005, %v1090
      %v1092 = vpop.f32.mrb[0].mxu0
      %v1093 = vpop.f32.mrb[0].mxu0
      %v1094 = vadd.f32 %v1006, %v1093
      %v1095 = vpop.f32.mrb[0].mxu0
      %1096 = vmatprep.mubr.bf16.mxu0 0
      %1097 = vmatmul.mubr.bf16.gmra.mrb[0].mxu0 %v1031
      %v1098 = vpop.f32.mrb[0].mxu0
      %v1099 = vadd.f32 %v1007, %v1098
      %v1100 = vpop.f32.mrb[0].mxu0
      %v1101 = vpop.f32.mrb[0].mxu0
      %v1102 = vadd.f32 %v1008, %v1101
      %v1103 = vpop.f32.mrb[0].mxu0
      %1104 = vmatprep.mubr.bf16.mxu0 0
      %1105 = vmatmul.mubr.bf16.gmra.mrb[0].mxu0 %v1034
      %v1106 = vpop.f32.mrb[0].mxu0
      %v1107 = vadd.f32 %v1009, %v1106
      %v1108 = vpop.f32.mrb[0].mxu0
      %v1109 = vpop.f32.mrb[0].mxu0
      %v1110 = vadd.f32 %v1010, %v1109
      %v1111 = vpop.f32.mrb[0].mxu0
      %1112 = vdwg.mxu0
      %v1113 = vsel %vm532, %v1083, -inf
      %1114 = vmax.xlane.f32.xlu0 %v1113
      %v1115 = vpop.xlane.xlu0 %1114
      %v1116 = vsel %vm532, %v1086, -inf
      %1117 = vmax.xlane.f32.xlu0 %v1116
      %v1118 = vpop.xlane.xlu0 %1117
      %v1119 = vsel %vm532, %v1091, -inf
      %1120 = vmax.xlane.f32.xlu0 %v1119
      %v1121 = vpop.xlane.xlu0 %1120
      %v1122 = vsel %vm532, %v1094, -inf
      %1123 = vmax.xlane.f32.xlu0 %v1122
      %v1124 = vpop.xlane.xlu0 %1123
      %v1125 = vsel %vm532, %v1099, -inf
      %1126 = vmax.xlane.f32.xlu0 %v1125
      %v1127 = vpop.xlane.xlu0 %1126
      %v1128 = vsel %vm532, %v1102, -inf
      %1129 = vmax.xlane.f32.xlu0 %v1128
      %v1130 = vpop.xlane.xlu0 %1129
      %v1131 = vsel %vm532, %v1107, -inf
      %1132 = vmax.xlane.f32.xlu0 %v1131
      %v1133 = vpop.xlane.xlu0 %1132
      %v1134 = vsel %vm532, %v1110, -inf
      %1135 = vmax.xlane.f32.xlu0 %v1134
      %v1136 = vpop.xlane.xlu0 %1135
      %v1137 = vsub.f32 %v1083, %v1115
      %v1138 = vsub.f32 %v1086, %v1118
      %v1139 = vsub.f32 %v1091, %v1121
      %v1140 = vsub.f32 %v1094, %v1124
      %v1141 = vsub.f32 %v1099, %v1127
      %v1142 = vsub.f32 %v1102, %v1130
      %v1143 = vsub.f32 %v1107, %v1133
      %v1144 = vsub.f32 %v1110, %v1136
      %v1145 = vmul.f32 %v1137, 1.442695
      %v1146 = vpow.pop %v1145
      %v1147 = vmul.f32 %v1138, 1.442695
      %v1148 = vpow.pop %v1147
      %v1149 = vmul.f32 %v1139, 1.442695
      %v1150 = vpow.pop %v1149
      %v1151 = vmul.f32 %v1140, 1.442695
      %v1152 = vpow.pop %v1151
      %v1153 = vmul.f32 %v1141, 1.442695
      %v1154 = vpow.pop %v1153
      %v1155 = vmul.f32 %v1142, 1.442695
      %v1156 = vpow.pop %v1155
      %v1157 = vmul.f32 %v1143, 1.442695
      %v1158 = vpow.pop %v1157
      %v1159 = vmul.f32 %v1144, 1.442695
      %v1160 = vpow.pop %v1159
      %v1161 = vsel %vm532, %v1146, 0.0
      %1162 = vadd.xlane.f32.xlu0 %v1161
      %v1163 = vpop.xlane.xlu0 %1162
      %v1164 = vsel %vm532, %v1148, 0.0
      %1165 = vadd.xlane.f32.xlu0 %v1164
      %v1166 = vpop.xlane.xlu0 %1165
      %v1167 = vsel %vm532, %v1150, 0.0
      %1168 = vadd.xlane.f32.xlu0 %v1167
      %v1169 = vpop.xlane.xlu0 %1168
      %v1170 = vsel %vm532, %v1152, 0.0
      %1171 = vadd.xlane.f32.xlu0 %v1170
      %v1172 = vpop.xlane.xlu0 %1171
      %v1173 = vsel %vm532, %v1154, 0.0
      %1174 = vadd.xlane.f32.xlu0 %v1173
      %v1175 = vpop.xlane.xlu0 %1174
      %v1176 = vsel %vm532, %v1156, 0.0
      %1177 = vadd.xlane.f32.xlu0 %v1176
      %v1178 = vpop.xlane.xlu0 %1177
      %v1179 = vsel %vm532, %v1158, 0.0
      %1180 = vadd.xlane.f32.xlu0 %v1179
      %v1181 = vpop.xlane.xlu0 %1180
      %v1182 = vsel %vm532, %v1160, 0.0
      %1183 = vadd.xlane.f32.xlu0 %v1182
      %v1184 = vpop.xlane.xlu0 %1183
      %v1185 = vrcp.pop %v1163
      %v1186 = vrcp.pop %v1166
      %v1187 = vrcp.pop %v1169
      %v1188 = vrcp.pop %v1172
      %v1189 = vrcp.pop %v1175
      %v1190 = vrcp.pop %v1178
      %v1191 = vrcp.pop %v1181
      %v1192 = vrcp.pop %v1184
      %v1193 = vmul.f32 %v1146, %v1185
      %v1194 = vmul.f32 %v1148, %v1186
      %v1195 = vmul.f32 %v1150, %v1187
      %v1196 = vmul.f32 %v1152, %v1188
      %v1197 = vmul.f32 %v1154, %v1189
      %v1198 = vmul.f32 %v1156, %v1190
      %v1199 = vmul.f32 %v1158, %v1191
      %v1200 = vmul.f32 %v1160, %v1192
      %v1201 = vpack.c.bf16 %v1194, %v1193
      %v1202 = vpack.c.bf16 %v1196, %v1195
      %v1203 = vpack.c.bf16 %v1198, %v1197
      %v1204 = vpack.c.bf16 %v1200, %v1199
      %1205 = vrot.lane.b32.xlu0 %v999, 60
      %v1206 = vpop.permute.xlu0 %1205
      %1207 = vrot.lane.b32.xlu0 %v1000, 60
      %v1208 = vpop.permute.xlu0 %1207
      %1209 = vrot.lane.b32.xlu0 %v1001, 60
      %v1210 = vpop.permute.xlu0 %1209
      %1211 = vrot.lane.b32.xlu0 %v1002, 60
      %v1212 = vpop.permute.xlu0 %1211
      %v1218 = vsel %vm532, %v1201, 0
      %v1221 = vsel %vm532, %v1202, 0
      %v1224 = vsel %vm532, %v1203, 0
      %v1227 = vsel %vm532, %v1204, 0
      %1229 = vmatprep.subr.bf16.mxu0 0
      %1230 = vmatpush1.bf16.msra.mxu0 %v1206
      %1231 = vmatprep.subr.bf16.mxu0 0
      %1232 = vmatpush1.bf16.msra.mxu0 %v1208
      %1233 = vmatprep.subr.bf16.mxu0 0
      %1234 = vmatpush1.bf16.msra.mxu0 %v1210
      %1235 = vmatprep.subr.bf16.mxu0 0
      %1236 = vmatpush1.bf16.msra.mxu0 %v1212
      %1237 = vmatprep.subr.bf16.mxu0 0
      %1238 = vmatpush1.bf16.msra.mxu0 0
      %1239 = vmatprep.subr.bf16.mxu0 0
      %1240 = vmatpush1.bf16.msra.mxu0 0
      %1241 = vmatprep.subr.bf16.mxu0 0
      %1242 = vmatpush1.bf16.msra.mxu0 0
      %1243 = vmatprep.subr.bf16.mxu0 0
      %1244 = vmatpush1.bf16.msra.mxu0 0
      %1245 = vmatprep.subr.bf16.mxu0 0
      %1246 = vmatpush1.bf16.msra.mxu0 0
      %1247 = vmatprep.subr.bf16.mxu0 0
      %1248 = vmatpush1.bf16.msra.mxu0 0
      %1249 = vmatprep.subr.bf16.mxu0 0
      %1250 = vmatpush1.bf16.msra.mxu0 0
      %1251 = vmatprep.subr.bf16.mxu0 0
      %1252 = vmatpush1.bf16.msra.mxu0 0
      %1253 = vmatprep.subr.bf16.mxu0 0
      %1254 = vmatpush1.bf16.msra.mxu0 0
      %1255 = vmatprep.subr.bf16.mxu0 0
      %1256 = vmatpush1.bf16.msra.mxu0 0
      %1257 = vmatprep.subr.bf16.mxu0 0
      %1258 = vmatpush1.bf16.msra.mxu0 0
      %1259 = vmatprep.subr.bf16.mxu0 0
      %1260 = vmatpush1.bf16.msra.mxu0 0
      %1261 = vmatprep.mubr.bf16.mxu0 0
      %1262 = vmatmul.mubr.bf16.gmra.mrb[0].mxu0 %v1218
      %v1263 = vpop.f32.mrb[0].mxu0
      %v1264 = vadd.f32 0.0, %v1263
      %v1265 = vpop.f32.mrb[0].mxu0
      %v1266 = vpop.f32.mrb[0].mxu0
      %v1267 = vadd.f32 0.0, %v1266
      %v1268 = vpop.f32.mrb[0].mxu0
      %1269 = vmatprep.mubr.bf16.mxu0 0
      %1270 = vmatmul.mubr.bf16.gmra.mrb[0].mxu0 %v1221
      %v1271 = vpop.f32.mrb[0].mxu0
      %v1272 = vadd.f32 0.0, %v1271
      %v1273 = vpop.f32.mrb[0].mxu0
      %v1274 = vpop.f32.mrb[0].mxu0
      %v1275 = vadd.f32 0.0, %v1274
      %v1276 = vpop.f32.mrb[0].mxu0
      %1277 = vmatprep.mubr.bf16.mxu0 0
      %1278 = vmatmul.mubr.bf16.gmra.mrb[0].mxu0 %v1224
      %v1279 = vpop.f32.mrb[0].mxu0
      %v1280 = vadd.f32 0.0, %v1279
      %v1281 = vpop.f32.mrb[0].mxu0
      %v1282 = vpop.f32.mrb[0].mxu0
      %v1283 = vadd.f32 0.0, %v1282
      %v1284 = vpop.f32.mrb[0].mxu0
      %1285 = vmatprep.mubr.bf16.mxu0 0
      %1286 = vmatmul.mubr.bf16.gmra.mrb[0].mxu0 %v1227
      %v1287 = vpop.f32.mrb[0].mxu0
      %v1288 = vadd.f32 0.0, %v1287
      %v1289 = vpop.f32.mrb[0].mxu0
      %v1290 = vpop.f32.mrb[0].mxu0
      %v1291 = vadd.f32 0.0, %v1290
      %v1292 = vpop.f32.mrb[0].mxu0
      %1293 = vdwg.mxu0
      %v1294 = vpack.c.bf16 %v1267, %v1264
      %v1295 = vpack.c.bf16 %v1275, %v1272
      %v1296 = vpack.c.bf16 %v1283, %v1280
      %v1297 = vpack.c.bf16 %v1291, %v1288
      %v1298 = vld [vmem:[%s7] sm:$0xf]
      %v1299 = vld [vmem:[%s7 + $0x4] sm:$0xf]
      %v1300 = vld [vmem:[%s7 + $0x8] sm:$0xf]
      %v1301 = vld [vmem:[%s7 + $0xc] sm:$0xf]
      %v1302 = vld [vmem:[%s7 + $0x10] sm:$0x1]
      %v1308 = vunpack.c.l.b16 %v1298
      %v1309 = vunpack.c.l.b16 %v1299
      %v1310 = vunpack.c.l.b16 %v1300
      %v1311 = vunpack.c.l.b16 %v1301
      %v1312 = vunpack.c.l.b16 %v1302
      %v1313 = vpack.c.b16 %v1309, %v1308
      %v1314 = vpack.c.b16 %v1311, %v1310
      %v1315 = vpack.c.b16 %v1312, %v1312
      %v1319 = vsel %vm1023, %v1294, 0
      %v1322 = vsel %vm1023, %v1295, 0
      %v1325 = vsel %vm1023, %v1296, 0
      %v1328 = vsel %vm1023, %v1297, 0
      %vm1330 = vcmask 1040384
      %v1332 = vsel %vm1330, %v1315, 0
      %1334 = vmatprep.subr.bf16.mxu0 0
      %1335 = vmatpush1.bf16.msra.mxu0 %v1313
      %1336 = vmatprep.subr.bf16.mxu0 0
      %1337 = vmatpush1.bf16.msra.mxu0 %v1314
      %1338 = vmatprep.subr.bf16.mxu0 0
      %1339 = vmatpush1.bf16.msra.mxu0 %v1332
      %1340 = vmatprep.subr.bf16.mxu0 0
      %1341 = vmatpush1.bf16.msra.mxu0 0
      %1342 = vmatprep.subr.bf16.mxu0 0
      %1343 = vmatpush1.bf16.msra.mxu0 0
      %1344 = vmatprep.subr.bf16.mxu0 0
      %1345 = vmatpush1.bf16.msra.mxu0 0
      %1346 = vmatprep.subr.bf16.mxu0 0
      %1347 = vmatpush1.bf16.msra.mxu0 0
      %1348 = vmatprep.subr.bf16.mxu0 0
      %1349 = vmatpush1.bf16.msra.mxu0 0
      %1350 = vmatprep.subr.bf16.mxu0 0
      %1351 = vmatpush1.bf16.msra.mxu0 0
      %1352 = vmatprep.subr.bf16.mxu0 0
      %1353 = vmatpush1.bf16.msra.mxu0 0
      %1354 = vmatprep.subr.bf16.mxu0 0
      %1355 = vmatpush1.bf16.msra.mxu0 0
      %1356 = vmatprep.subr.bf16.mxu0 0
      %1357 = vmatpush1.bf16.msra.mxu0 0
      %1358 = vmatprep.subr.bf16.mxu0 0
      %1359 = vmatpush1.bf16.msra.mxu0 0
      %1360 = vmatprep.subr.bf16.mxu0 0
      %1361 = vmatpush1.bf16.msra.mxu0 0
      %1362 = vmatprep.subr.bf16.mxu0 0
      %1363 = vmatpush1.bf16.msra.mxu0 0
      %1364 = vmatprep.subr.bf16.mxu0 0
      %1365 = vmatpush1.bf16.msra.mxu0 0
      %1366 = vmatprep.mubr.bf16.mxu0 0
      %1367 = vmatmul.mubr.bf16.gmra.mrb[0].mxu0 %v1319
      %v1368 = vpop.f32.mrb[0].mxu0
      %v1369 = vadd.f32 0.0, %v1368
      %v1370 = vpop.f32.mrb[0].mxu0
      %v1371 = vpop.f32.mrb[0].mxu0
      %v1372 = vadd.f32 0.0, %v1371
      %v1373 = vpop.f32.mrb[0].mxu0
      %1374 = vmatprep.mubr.bf16.mxu0 0
      %1375 = vmatmul.mubr.bf16.gmra.mrb[0].mxu0 %v1322
      %v1376 = vpop.f32.mrb[0].mxu0
      %v1377 = vadd.f32 0.0, %v1376
      %v1378 = vpop.f32.mrb[0].mxu0
      %v1379 = vpop.f32.mrb[0].mxu0
      %v1380 = vadd.f32 0.0, %v1379
      %v1381 = vpop.f32.mrb[0].mxu0
      %1382 = vmatprep.mubr.bf16.mxu0 0
      %1383 = vmatmul.mubr.bf16.gmra.mrb[0].mxu0 %v1325
      %v1384 = vpop.f32.mrb[0].mxu0
      %v1385 = vadd.f32 0.0, %v1384
      %v1386 = vpop.f32.mrb[0].mxu0
      %v1387 = vpop.f32.mrb[0].mxu0
      %v1388 = vadd.f32 0.0, %v1387
      %v1389 = vpop.f32.mrb[0].mxu0
      %1390 = vmatprep.mubr.bf16.mxu0 0
      %1391 = vmatmul.mubr.bf16.gmra.mrb[0].mxu0 %v1328
      %v1392 = vpop.f32.mrb[0].mxu0
      %v1393 = vadd.f32 0.0, %v1392
      %v1394 = vpop.f32.mrb[0].mxu0
      %v1395 = vpop.f32.mrb[0].mxu0
      %v1396 = vadd.f32 0.0, %v1395
      %v1397 = vpop.f32.mrb[0].mxu0
      %1398 = vdwg.mxu0
      %v1399 = vld [vmem:[%s2] sm:$0xf]
      %v1400 = vld [vmem:[%s2 + $0x4] sm:$0xf]
      %v1401 = vld [vmem:[%s2 + $0x8] sm:$0xf]
      %v1402 = vld [vmem:[%s2 + $0xc] sm:$0xf]
      %v1403 = vld [vmem:[%s2 + $0x10] sm:$0xf]
      %v1404 = vld [vmem:[%s2 + $0x14] sm:$0xf]
      %v1405 = vld [vmem:[%s2 + $0x18] sm:$0xf]
      %v1406 = vld [vmem:[%s2 + $0x1c] sm:$0xf]
      %v1407 = vpack.c.bf16 %v1372, %v1369
      %v1408 = vpack.c.bf16 %v1380, %v1377
      %v1409 = vpack.c.bf16 %v1388, %v1385
      %v1410 = vpack.c.bf16 %v1396, %v1393
      %v1419 = vunpack.c.l.b16 %v1399
      %v1420 = vunpack.c.l.b16 %v1400
      %v1421 = vunpack.c.l.b16 %v1401
      %v1422 = vunpack.c.l.b16 %v1402
      %v1423 = vunpack.c.l.b16 %v1403
      %v1424 = vunpack.c.l.b16 %v1404
      %v1425 = vunpack.c.l.b16 %v1405
      %v1426 = vunpack.c.l.b16 %v1406
      %v1427 = vpack.c.b16 %v1420, %v1419
      %v1428 = vpack.c.b16 %v1422, %v1421
      %v1429 = vpack.c.b16 %v1424, %v1423
      %v1430 = vpack.c.b16 %v1426, %v1425
      %v1432 = vsel %vm532, %v1427, 0
      %v1435 = vsel %vm532, %v1428, 0
      %v1438 = vsel %vm532, %v1429, 0
      %v1441 = vsel %vm532, %v1430, 0
      %1443 = vmatprep.subr.bf16.mxu0 0
      %1444 = vmatpush1.bf16.msra.mxu0 %v1407
      %1445 = vmatprep.subr.bf16.mxu0 0
      %1446 = vmatpush1.bf16.msra.mxu0 %v1408
      %1447 = vmatprep.subr.bf16.mxu0 0
      %1448 = vmatpush1.bf16.msra.mxu0 %v1409
      %1449 = vmatprep.subr.bf16.mxu0 0
      %1450 = vmatpush1.bf16.msra.mxu0 %v1410
      %1451 = vmatprep.subr.bf16.mxu0 0
      %1452 = vmatpush1.bf16.msra.mxu0 0
      %1453 = vmatprep.subr.bf16.mxu0 0
      %1454 = vmatpush1.bf16.msra.mxu0 0
      %1455 = vmatprep.subr.bf16.mxu0 0
      %1456 = vmatpush1.bf16.msra.mxu0 0
      %1457 = vmatprep.subr.bf16.mxu0 0
      %1458 = vmatpush1.bf16.msra.mxu0 0
      %1459 = vmatprep.subr.bf16.mxu0 0
      %1460 = vmatpush1.bf16.msra.mxu0 0
      %1461 = vmatprep.subr.bf16.mxu0 0
      %1462 = vmatpush1.bf16.msra.mxu0 0
      %1463 = vmatprep.subr.bf16.mxu0 0
      %1464 = vmatpush1.bf16.msra.mxu0 0
      %1465 = vmatprep.subr.bf16.mxu0 0
      %1466 = vmatpush1.bf16.msra.mxu0 0
      %1467 = vmatprep.subr.bf16.mxu0 0
      %1468 = vmatpush1.bf16.msra.mxu0 0
      %1469 = vmatprep.subr.bf16.mxu0 0
      %1470 = vmatpush1.bf16.msra.mxu0 0
      %1471 = vmatprep.subr.bf16.mxu0 0
      %1472 = vmatpush1.bf16.msra.mxu0 0
      %1473 = vmatprep.subr.bf16.mxu0 0
      %1474 = vmatpush1.bf16.msra.mxu0 0
      %1475 = vmatprep.mubr.bf16.mxu0 0
      %1476 = vmatmul.mubr.bf16.gmra.mrb[0].mxu0 %v1432
      %v1477 = vpop.f32.mrb[0].mxu0
      %v1478 = vadd.f32 0.0, %v1477
      %v1479 = vpop.f32.mrb[0].mxu0
      %v1480 = vpop.f32.mrb[0].mxu0
      %v1481 = vadd.f32 0.0, %v1480
      %v1482 = vpop.f32.mrb[0].mxu0
      %1483 = vmatprep.mubr.bf16.mxu0 0
      %1484 = vmatmul.mubr.bf16.gmra.mrb[0].mxu0 %v1435
      %v1485 = vpop.f32.mrb[0].mxu0
      %v1486 = vadd.f32 0.0, %v1485
      %v1487 = vpop.f32.mrb[0].mxu0
      %v1488 = vpop.f32.mrb[0].mxu0
      %v1489 = vadd.f32 0.0, %v1488
      %v1490 = vpop.f32.mrb[0].mxu0
      %1491 = vmatprep.mubr.bf16.mxu0 0
      %1492 = vmatmul.mubr.bf16.gmra.mrb[0].mxu0 %v1438
      %v1493 = vpop.f32.mrb[0].mxu0
      %v1494 = vadd.f32 0.0, %v1493
      %v1495 = vpop.f32.mrb[0].mxu0
      %v1496 = vpop.f32.mrb[0].mxu0
      %v1497 = vadd.f32 0.0, %v1496
      %v1498 = vpop.f32.mrb[0].mxu0
      %1499 = vmatprep.mubr.bf16.mxu0 0
      %1500 = vmatmul.mubr.bf16.gmra.mrb[0].mxu0 %v1441
      %v1501 = vpop.f32.mrb[0].mxu0
      %v1502 = vadd.f32 0.0, %v1501
      %v1503 = vpop.f32.mrb[0].mxu0
      %v1504 = vpop.f32.mrb[0].mxu0
      %v1505 = vadd.f32 0.0, %v1504
      %v1506 = vpop.f32.mrb[0].mxu0
      %1507 = vdwg.mxu0
      %1516 = vrot.lane.b32.xlu0 %v1478, 96
      %v1517 = vpop.permute.xlu0 %1516
      %1518 = vrot.lane.b32.xlu0 %v1481, 96
      %v1519 = vpop.permute.xlu0 %1518
      %1520 = vrot.lane.b32.xlu0 %v1486, 96
      %v1521 = vpop.permute.xlu0 %1520
      %1522 = vrot.lane.b32.xlu0 %v1489, 96
      %v1523 = vpop.permute.xlu0 %1522
      %1524 = vrot.lane.b32.xlu0 %v1494, 96
      %v1525 = vpop.permute.xlu0 %1524
      %1526 = vrot.lane.b32.xlu0 %v1497, 96
      %v1527 = vpop.permute.xlu0 %1526
      %1528 = vrot.lane.b32.xlu0 %v1502, 96
      %v1529 = vpop.permute.xlu0 %1528
      %1530 = vrot.lane.b32.xlu0 %v1505, 96
      %v1531 = vpop.permute.xlu0 %1530
      %v1540 = vadd.f32 %v834, %v1517
      %v1541 = vadd.f32 %v835, %v1519
      %v1542 = vadd.f32 %v836, %v1521
      %v1543 = vadd.f32 %v837, %v1523
      %v1544 = vadd.f32 %v838, %v1525
      %v1545 = vadd.f32 %v839, %v1527
      %v1546 = vadd.f32 %v840, %v1529
      %v1547 = vadd.f32 %v841, %v1531
      %v1548 = vld [vmem:[%s9] sm:$0x1]
      %v1549 = vlaneseq
      %v1550 = vshrl.u32 %v1549, 7
      %v1551 = vsub.s32 0, %v1550
      %v1552 = vrot.slane %v1548, %v1551
      %1554 = vrot.lane.b32.xlu0 %v1552, 96
      %v1555 = vpop.permute.xlu0 %1554
      %v1557 = vadd.f32 %v1540, %v1555
      %v1558 = vadd.f32 %v1541, %v1555
      %v1559 = vadd.f32 %v1542, %v1555
      %v1560 = vadd.f32 %v1543, %v1555
      %v1561 = vadd.f32 %v1544, %v1555
      %v1562 = vadd.f32 %v1545, %v1555
      %v1563 = vadd.f32 %v1546, %v1555
      %v1564 = vadd.f32 %v1547, %v1555
      %1573 = vrot.lane.b32.xlu0 %v1557, 64
      %v1574 = vpop.permute.xlu0 %1573
      %1575 = vrot.lane.b32.xlu0 %v1558, 64
      %v1576 = vpop.permute.xlu0 %1575
      %1577 = vrot.lane.b32.xlu0 %v1559, 64
      %v1578 = vpop.permute.xlu0 %1577
      %1579 = vrot.lane.b32.xlu0 %v1560, 64
      %v1580 = vpop.permute.xlu0 %1579
      %1581 = vrot.lane.b32.xlu0 %v1561, 64
      %v1582 = vpop.permute.xlu0 %1581
      %1583 = vrot.lane.b32.xlu0 %v1562, 64
      %v1584 = vpop.permute.xlu0 %1583
      %1585 = vrot.lane.b32.xlu0 %v1563, 64
      %v1586 = vpop.permute.xlu0 %1585
      %1587 = vrot.lane.b32.xlu0 %v1564, 64
      %v1588 = vpop.permute.xlu0 %1587
      %vm1597 = vcmask 523520
      %1598 = vst.msk [vmem:[#allocation2] sm:$0xff] %vm1597, %v1574
      %1599 = vst.msk [vmem:[#allocation2 + $0x8] sm:$0xff] %vm1597, %v1576
      %1600 = vst.msk [vmem:[#allocation2 + $0x10] sm:$0xff] %vm1597, %v1578
      %1601 = vst.msk [vmem:[#allocation2 + $0x18] sm:$0xff] %vm1597, %v1580
      %1602 = vst.msk [vmem:[#allocation2 + $0x20] sm:$0xff] %vm1597, %v1582
      %1603 = vst.msk [vmem:[#allocation2 + $0x28] sm:$0xff] %vm1597, %v1584
      %1604 = vst.msk [vmem:[#allocation2 + $0x30] sm:$0xff] %vm1597, %v1586
      %1605 = vst.msk [vmem:[#allocation2 + $0x38] sm:$0xff] %vm1597, %v1588
      %v1606 = vpack.c.bf16 %v1558, %v1557
      %v1607 = vpack.c.bf16 %v1560, %v1559
      %v1608 = vpack.c.bf16 %v1562, %v1561
      %v1609 = vpack.c.bf16 %v1564, %v1563
      %v1610 = vld [vmem:[%s8] sm:$0xf]
      %v1611 = vld [vmem:[%s8 + $0x4] sm:$0xf]
      %v1612 = vld [vmem:[%s8 + $0x8] sm:$0xf]
      %v1613 = vld [vmem:[%s8 + $0xc] sm:$0xf]
      %v1614 = vld [vmem:[%s9 + $0x1] sm:$0x1]
      %v1615 = vlaneseq
      %v1616 = vshrl.u32 %v1615, 7
      %v1617 = vsub.s32 0, %v1616
      %v1618 = vrot.slane %v1614, %v1617
      %1623 = vrot.lane.b32.xlu0 %v1606, 32
      %v1624 = vpop.permute.xlu0 %1623
      %1625 = vrot.lane.b32.xlu0 %v1607, 32
      %v1626 = vpop.permute.xlu0 %1625
      %1627 = vrot.lane.b32.xlu0 %v1608, 32
      %v1628 = vpop.permute.xlu0 %1627
      %1629 = vrot.lane.b32.xlu0 %v1609, 32
      %v1630 = vpop.permute.xlu0 %1629
      %v1635 = vunpack.c.l.b16 %v1610
      %v1636 = vunpack.c.l.b16 %v1611
      %v1637 = vunpack.c.l.b16 %v1612
      %v1638 = vunpack.c.l.b16 %v1613
      %v1639 = vpack.c.b16 %v1636, %v1635
      %v1640 = vpack.c.b16 %v1638, %v1637
      %v1644 = vsel %vm472, %v1624, 0
      %v1647 = vsel %vm472, %v1626, 0
      %v1650 = vsel %vm472, %v1628, 0
      %v1653 = vsel %vm472, %v1630, 0
      %1655 = vmatprep.subr.bf16.mxu0 0
      %1656 = vmatpush1.bf16.msra.mxu0 %v1639
      %1657 = vmatprep.subr.bf16.mxu0 0
      %1658 = vmatpush1.bf16.msra.mxu0 %v1640
      %1659 = vmatprep.subr.bf16.mxu0 0
      %1660 = vmatpush1.bf16.msra.mxu0 0
      %1661 = vmatprep.subr.bf16.mxu0 0
      %1662 = vmatpush1.bf16.msra.mxu0 0
      %1663 = vmatprep.subr.bf16.mxu0 0
      %1664 = vmatpush1.bf16.msra.mxu0 0
      %1665 = vmatprep.subr.bf16.mxu0 0
      %1666 = vmatpush1.bf16.msra.mxu0 0
      %1667 = vmatprep.subr.bf16.mxu0 0
      %1668 = vmatpush1.bf16.msra.mxu0 0
      %1669 = vmatprep.subr.bf16.mxu0 0
      %1670 = vmatpush1.bf16.msra.mxu0 0
      %1671 = vmatprep.subr.bf16.mxu0 0
      %1672 = vmatpush1.bf16.msra.mxu0 0
      %1673 = vmatprep.subr.bf16.mxu0 0
      %1674 = vmatpush1.bf16.msra.mxu0 0
      %1675 = vmatprep.subr.bf16.mxu0 0
      %1676 = vmatpush1.bf16.msra.mxu0 0
      %1677 = vmatprep.subr.bf16.mxu0 0
      %1678 = vmatpush1.bf16.msra.mxu0 0
      %1679 = vmatprep.subr.bf16.mxu0 0
      %1680 = vmatpush1.bf16.msra.mxu0 0
      %1681 = vmatprep.subr.bf16.mxu0 0
      %1682 = vmatpush1.bf16.msra.mxu0 0
      %1683 = vmatprep.subr.bf16.mxu0 0
      %1684 = vmatpush1.bf16.msra.mxu0 0
      %1685 = vmatprep.subr.bf16.mxu0 0
      %1686 = vmatpush1.bf16.msra.mxu0 0
      %1687 = vmatprep.mubr.bf16.mxu0 0
      %1688 = vmatmul.mubr.bf16.gmra.mrb[0].mxu0 %v1644
      %v1689 = vpop.f32.mrb[0].mxu0
      %v1690 = vadd.f32 %v1618, %v1689
      %v1691 = vpop.f32.mrb[0].mxu0
      %v1692 = vpop.f32.mrb[0].mxu0
      %v1693 = vadd.f32 %v1618, %v1692
      %v1694 = vpop.f32.mrb[0].mxu0
      %1695 = vmatprep.mubr.bf16.mxu0 0
      %1696 = vmatmul.mubr.bf16.gmra.mrb[0].mxu0 %v1647
      %v1697 = vpop.f32.mrb[0].mxu0
      %v1698 = vadd.f32 %v1618, %v1697
      %v1699 = vpop.f32.mrb[0].mxu0
      %v1700 = vpop.f32.mrb[0].mxu0
      %v1701 = vadd.f32 %v1618, %v1700
      %v1702 = vpop.f32.mrb[0].mxu0
      %1703 = vmatprep.mubr.bf16.mxu0 0
      %1704 = vmatmul.mubr.bf16.gmra.mrb[0].mxu0 %v1650
      %v1705 = vpop.f32.mrb[0].mxu0
      %v1706 = vadd.f32 %v1618, %v1705
      %v1707 = vpop.f32.mrb[0].mxu0
      %v1708 = vpop.f32.mrb[0].mxu0
      %v1709 = vadd.f32 %v1618, %v1708
      %v1710 = vpop.f32.mrb[0].mxu0
      %1711 = vmatprep.mubr.bf16.mxu0 0
      %1712 = vmatmul.mubr.bf16.gmra.mrb[0].mxu0 %v1653
      %v1713 = vpop.f32.mrb[0].mxu0
      %v1714 = vadd.f32 %v1618, %v1713
      %v1715 = vpop.f32.mrb[0].mxu0
      %v1716 = vpop.f32.mrb[0].mxu0
      %v1717 = vadd.f32 %v1618, %v1716
      %v1718 = vpop.f32.mrb[0].mxu0
      %1719 = vdwg.mxu0
      %v1720 = vsel %vm472, %v1690, 0.0
      %1721 = vadd.xlane.f32.xlu0 %v1720
      %v1722 = vpop.xlane.xlu0 %1721
      %v1723 = vsel %vm472, %v1693, 0.0
      %1724 = vadd.xlane.f32.xlu0 %v1723
      %v1725 = vpop.xlane.xlu0 %1724
      %v1726 = vsel %vm472, %v1698, 0.0
      %1727 = vadd.xlane.f32.xlu0 %v1726
      %v1728 = vpop.xlane.xlu0 %1727
      %v1729 = vsel %vm472, %v1701, 0.0
      %1730 = vadd.xlane.f32.xlu0 %v1729
      %v1731 = vpop.xlane.xlu0 %1730
      %v1732 = vsel %vm472, %v1706, 0.0
      %1733 = vadd.xlane.f32.xlu0 %v1732
      %v1734 = vpop.xlane.xlu0 %1733
      %v1735 = vsel %vm472, %v1709, 0.0
      %1736 = vadd.xlane.f32.xlu0 %v1735
      %v1737 = vpop.xlane.xlu0 %1736
      %v1738 = vsel %vm472, %v1714, 0.0
      %1739 = vadd.xlane.f32.xlu0 %v1738
      %v1740 = vpop.xlane.xlu0 %1739
      %v1741 = vsel %vm472, %v1717, 0.0
      %1742 = vadd.xlane.f32.xlu0 %v1741
      %v1743 = vpop.xlane.xlu0 %1742
      %v1744 = vrcp.pop 32.0
      %v1745 = vmul.f32 %v1722, %v1744
      %v1746 = vmul.f32 %v1725, %v1744
      %v1747 = vmul.f32 %v1728, %v1744
      %v1748 = vmul.f32 %v1731, %v1744
      %v1749 = vmul.f32 %v1734, %v1744
      %v1750 = vmul.f32 %v1737, %v1744
      %v1751 = vmul.f32 %v1740, %v1744
      %v1752 = vmul.f32 %v1743, %v1744
      %v1753 = vsub.f32 %v1690, %v1745
      %v1754 = vsub.f32 %v1693, %v1746
      %v1755 = vsub.f32 %v1698, %v1747
      %v1756 = vsub.f32 %v1701, %v1748
      %v1757 = vsub.f32 %v1706, %v1749
      %v1758 = vsub.f32 %v1709, %v1750
      %v1759 = vsub.f32 %v1714, %v1751
      %v1760 = vsub.f32 %v1717, %v1752
      %v1761 = vmul.f32 %v1753, %v1753
      %v1762 = vmul.f32 %v1754, %v1754
      %v1763 = vmul.f32 %v1755, %v1755
      %v1764 = vmul.f32 %v1756, %v1756
      %v1765 = vmul.f32 %v1757, %v1757
      %v1766 = vmul.f32 %v1758, %v1758
      %v1767 = vmul.f32 %v1759, %v1759
      %v1768 = vmul.f32 %v1760, %v1760
      %v1769 = vsel %vm472, %v1761, 0.0
      %1770 = vadd.xlane.f32.xlu0 %v1769
      %v1771 = vpop.xlane.xlu0 %1770
      %v1772 = vsel %vm472, %v1762, 0.0
      %1773 = vadd.xlane.f32.xlu0 %v1772
      %v1774 = vpop.xlane.xlu0 %1773
      %v1775 = vsel %vm472, %v1763, 0.0
      %1776 = vadd.xlane.f32.xlu0 %v1775
      %v1777 = vpop.xlane.xlu0 %1776
      %v1778 = vsel %vm472, %v1764, 0.0
      %1779 = vadd.xlane.f32.xlu0 %v1778
      %v1780 = vpop.xlane.xlu0 %1779
      %v1781 = vsel %vm472, %v1765, 0.0
      %1782 = vadd.xlane.f32.xlu0 %v1781
      %v1783 = vpop.xlane.xlu0 %1782
      %v1784 = vsel %vm472, %v1766, 0.0
      %1785 = vadd.xlane.f32.xlu0 %v1784
      %v1786 = vpop.xlane.xlu0 %1785
      %v1787 = vsel %vm472, %v1767, 0.0
      %1788 = vadd.xlane.f32.xlu0 %v1787
      %v1789 = vpop.xlane.xlu0 %1788
      %v1790 = vsel %vm472, %v1768, 0.0
      %1791 = vadd.xlane.f32.xlu0 %v1790
      %v1792 = vpop.xlane.xlu0 %1791
      %v1793 = vmul.f32 %v1771, %v1744
      %v1794 = vmul.f32 %v1774, %v1744
      %v1795 = vmul.f32 %v1777, %v1744
      %v1796 = vmul.f32 %v1780, %v1744
      %v1797 = vmul.f32 %v1783, %v1744
      %v1798 = vmul.f32 %v1786, %v1744
      %v1799 = vmul.f32 %v1789, %v1744
      %v1800 = vmul.f32 %v1792, %v1744
      %v1801 = vadd.f32 %v1793, 1e-05
      %v1802 = vadd.f32 %v1794, 1e-05
      %v1803 = vadd.f32 %v1795, 1e-05
      %v1804 = vadd.f32 %v1796, 1e-05
      %v1805 = vadd.f32 %v1797, 1e-05
      %v1806 = vadd.f32 %v1798, 1e-05
      %v1807 = vadd.f32 %v1799, 1e-05
      %v1808 = vadd.f32 %v1800, 1e-05
      %v1809 = vrsqrt.pop %v1801
      %v1810 = vrsqrt.pop %v1802
      %v1811 = vrsqrt.pop %v1803
      %v1812 = vrsqrt.pop %v1804
      %v1813 = vrsqrt.pop %v1805
      %v1814 = vrsqrt.pop %v1806
      %v1815 = vrsqrt.pop %v1807
      %v1816 = vrsqrt.pop %v1808
      %v1817 = vmul.f32 %v1753, %v1809
      %v1818 = vmul.f32 %v1754, %v1810
      %v1819 = vmul.f32 %v1755, %v1811
      %v1820 = vmul.f32 %v1756, %v1812
      %v1821 = vmul.f32 %v1757, %v1813
      %v1822 = vmul.f32 %v1758, %v1814
      %v1823 = vmul.f32 %v1759, %v1815
      %v1824 = vmul.f32 %v1760, %v1816
      %v1825 = vld [vmem:[%s9 + $0x2] sm:$0x1]
      %v1826 = vlaneseq
      %v1827 = vshrl.u32 %v1826, 7
      %v1828 = vsub.s32 0, %v1827
      %v1829 = vrot.slane %v1825, %v1828
      %v1830 = vmul.f32 %v1817, %v1829
      %v1831 = vmul.f32 %v1818, %v1829
      %v1832 = vmul.f32 %v1819, %v1829
      %v1833 = vmul.f32 %v1820, %v1829
      %v1834 = vmul.f32 %v1821, %v1829
      %v1835 = vmul.f32 %v1822, %v1829
      %v1836 = vmul.f32 %v1823, %v1829
      %v1837 = vmul.f32 %v1824, %v1829
      %v1838 = vld [vmem:[%s9 + $0x3] sm:$0x1]
      %v1839 = vlaneseq
      %v1840 = vshrl.u32 %v1839, 7
      %v1841 = vsub.s32 0, %v1840
      %v1842 = vrot.slane %v1838, %v1841
      %v1843 = vadd.f32 %v1830, %v1842
      %v1844 = vadd.f32 %v1831, %v1842
      %v1845 = vadd.f32 %v1832, %v1842
      %v1846 = vadd.f32 %v1833, %v1842
      %v1847 = vadd.f32 %v1834, %v1842
      %v1848 = vadd.f32 %v1835, %v1842
      %v1849 = vadd.f32 %v1836, %v1842
      %v1850 = vadd.f32 %v1837, %v1842
      %1851 = vst.msk [vmem:[#allocation4] sm:$0xff] %vm472, %v1843
      %1852 = vst.msk [vmem:[#allocation4 + $0x8] sm:$0xff] %vm472, %v1844
      %1853 = vst.msk [vmem:[#allocation4 + $0x10] sm:$0xff] %vm472, %v1845
      %1854 = vst.msk [vmem:[#allocation4 + $0x18] sm:$0xff] %vm472, %v1846
      %1855 = vst.msk [vmem:[#allocation4 + $0x20] sm:$0xff] %vm472, %v1847
      %1856 = vst.msk [vmem:[#allocation4 + $0x28] sm:$0xff] %vm472, %v1848
      %1857 = vst.msk [vmem:[#allocation4 + $0x30] sm:$0xff] %vm472, %v1849
      %1858 = vst.msk [vmem:[#allocation4 + $0x38] sm:$0xff] %vm472, %v1850
      %1859 = vst.msk [vmem:[%s411] sm:$0xff] %vm472, %v1843
      %1860 = vst.msk [vmem:[%s411 + $0x8] sm:$0xff] %vm472, %v1844
      %1861 = vst.msk [vmem:[%s411 + $0x10] sm:$0xff] %vm472, %v1845
      %1862 = vst.msk [vmem:[%s411 + $0x18] sm:$0xff] %vm472, %v1846
      %1863 = vst.msk [vmem:[%s411 + $0x20] sm:$0xff] %vm472, %v1847
      %1864 = vst.msk [vmem:[%s411 + $0x28] sm:$0xff] %vm472, %v1848
      %1865 = vst.msk [vmem:[%s411 + $0x30] sm:$0xff] %vm472, %v1849
      %1866 = vst.msk [vmem:[%s411 + $0x38] sm:$0xff] %vm472, %v1850
      %s1867 = smul.u32 8, %s25
      %p1868 = scmp.lt.s32.totalorder %s26, 5
      %s1869 = scalar_select %p1868, %s26, 5
      %p1870 = scmp.lt.s32.totalorder %s1867, 15
      %s1871 = scalar_select %p1870, %s1867, 15
      %s1872 = smul.addr %s1869, 16
      %s1873 = sadd.s32 %s1871, %s1872
      %s1874 = smul.addr %s1873, 8
      %s1875 = scalar_lea.vmem %s10, %s1874
      // Predicated region
      $region65: #{forward.1} parent=59 // pred_check
        %p1876 = pneg %p274
      $region66: #{forward.1} parent=59 // pred_check_branch
        %1878 = sbr.rel (%p1876) target = $region68
      $region67: #{forward.1} parent=59 // pred_region
        %s1879 = smul.u32 8, %s25
      $region68: #{forward.1} parent=59 // pred_fallthru
        _
    $region60: #{forward.1} parent=5 // pred_fallthru
      _
    %p1880 = scmp.le.s32.totalorder 2, %s16
    // Predicated region
    $region69: #{forward.1} parent=5 // pred_check
      %p1881 = pneg %p1880
    $region70: #{forward.1} parent=5 // pred_check_branch
      %1883 = sbr.rel (%p1881) target = $region72
    $region71: #{forward.1} parent=5 // pred_region
      %s1884 = ssub.s32 %s16, 2
      // Predicated region
      $region73: #{forward.1} parent=71 // pred_check
        %p1885 = pneg %p280
      $region74: #{forward.1} parent=71 // pred_check_branch
        %1887 = sbr.rel (%p1885) target = $region76
      $region75: #{forward.1} parent=71 // pred_region
        %s1888 = smul.u32 8, %s27
        %p1889 = scmp.lt.s32.totalorder %s28, 5
        %s1890 = scalar_select %p1889, %s28, 5
        %p1891 = scmp.lt.s32.totalorder %s1888, 15
        %s1892 = scalar_select %p1891, %s1888, 15
        %s1893 = smul.addr %s1890, 16
        %s1894 = sadd.s32 %s1892, %s1893
        %s1895 = smul.addr %s1894, 8
        %s1896 = scalar_lea.vmem %s10, %s1895
      $region76: #{forward.1} parent=71 // pred_fallthru
        _
    $region72: #{forward.1} parent=5 // pred_fallthru
      _
  $region6: #{forward.1} parent=0 // loop_footer
    %s20 = sadd.s32 1, %s16
  $region7: #{forward.1} parent=0 // loop_footer_branch
    %15 = sbr.rel target = $region3
  $region8: #{forward.1} parent=0 // loop_exit
    _

</llo_original>
